<compile_context>
chip_gen: v7x
topology: tpu7x:2x2x1
jax: 0.10.0
libtpu: 0.0.40
codegen_flags: <defaults>
</compile_context>

<pallas_src>
import functools

import jax
import jax.numpy as jnp
from jax.experimental import pallas as pl
from jax.experimental.pallas import tpu as pltpu


def _gcn_fuzzy_kernel(x_ref, adj_ref, w2_ref, p_ref, f_ref, o_ref, *,
                      n_nodes_blk, embed_dim, fuzzy_units, num_channels,
                      samples_pad):
    f32 = jnp.float32
    D, U, C = embed_dim, fuzzy_units, num_channels
    DU = D * U
    Nb = n_nodes_blk
    Sp = samples_pad

    x = x_ref[...]                        # (Nb, 1)   stacked node features
    adj = adj_ref[...]                    # (Nb, Nb)  block-diagonal adjacency
    w2 = w2_ref[...]                      # (D, D)

    # packed small params: one dense (8, 128) slab
    w1 = p_ref[0:1, 0:D]                  # (1, D) Linear(1, D) weight (row)
    b1 = p_ref[1:2, 0:D]                  # (1, D)
    b2 = p_ref[2:3, 0:D]                  # (1, D)
    bout = p_ref[3:4, 0:1]                # (1, 1)

    # packed fuzzy constants: one dense (8, D*U) slab, lane index c = d*U + u
    centers = f_ref[0:1, :]               # (1, DU)  centers[d, u]
    neg_inv = f_ref[1:2, :]               # (1, DU)  -1 / (2*spread[u]^2)
    wrow = f_ref[2:3, :]                  # (1, DU)  wout[u] / D

    # ---- GCN layer 1: outer product on MXU, adj @ h, ReLU -------------------
    h = jnp.dot(x, w1, preferred_element_type=f32) + b1            # (Nb, D)
    h = jnp.maximum(jnp.dot(adj, h, preferred_element_type=f32), 0.0)

    # ---- GCN layer 2: Linear(D, D), adj @ h, ReLU ----------------------------
    h = jnp.dot(h, w2, preferred_element_type=f32) + b2
    h = jnp.maximum(jnp.dot(adj, h, preferred_element_type=f32), 0.0)

    # ---- SampleAggregator: channel mean via iota-built matmul ---------------
    # M[s, n] = 1/C  iff  s*C <= n < (s+1)*C   (padded sample rows stay zero)
    srow = jax.lax.broadcasted_iota(jnp.int32, (Sp, Nb), 0)
    ncol = jax.lax.broadcasted_iota(jnp.int32, (Sp, Nb), 1)
    lo = srow * C
    m_mat = jnp.where(jnp.logical_and(ncol >= lo, ncol < lo + C),
                      jnp.float32(1.0 / C), jnp.float32(0.0))
    agg = jnp.dot(m_mat, h, preferred_element_type=f32)            # (Sp, D)

    # ---- broadcast agg over fuzzy units (lane-dense, iota-built matmul) -----
    # E[d, c] = 1  iff  d*U <= c < (d+1)*U   =>  agg_b[s, d*U + u] = agg[s, d]
    drow = jax.lax.broadcasted_iota(jnp.int32, (D, DU), 0)
    ccol = jax.lax.broadcasted_iota(jnp.int32, (D, DU), 1)
    dlo = drow * U
    expand = jnp.where(jnp.logical_and(ccol >= dlo, ccol < dlo + U),
                       jnp.float32(1.0), jnp.float32(0.0))
    agg_b = jnp.dot(agg, expand, preferred_element_type=f32)       # (Sp, DU)

    # ---- FuzzyLayer (gaussian membership, dense, exp on EUP) ----------------
    diff = agg_b - centers
    mem = jnp.exp(diff * diff * neg_inv)                           # (Sp, DU)

    # ---- DefuzzLayer + Linear(U, 1): weighted lane reduction + sigmoid ------
    logits = jnp.sum(mem * wrow, axis=-1, keepdims=True) + bout    # (Sp, 1)
    probs = 1.0 / (1.0 + jnp.exp(-logits))
    o_ref[...] = jnp.broadcast_to(probs, o_ref.shape)              # (Sp, 128)


def pack_params(params):
    """Build the constant slabs ONCE (call outside the jitted forward)."""
    f32 = jnp.float32
    D, U = params["centers"].shape
    assert D <= 128, "p_slab row layout assumes embed_dim <= 128"

    p_slab = jnp.zeros((8, 128), f32)
    p_slab = p_slab.at[0, :D].set(params["w1"][0].astype(f32))
    p_slab = p_slab.at[1, :D].set(params["b1"][0].astype(f32))
    p_slab = p_slab.at[2, :D].set(params["b2"][0].astype(f32))
    p_slab = p_slab.at[3, 0].set(params["bout"][0, 0].astype(f32))

    centers_flat = params["centers"].astype(f32).reshape(1, D * U)   # c = d*U+u
    neg_inv_flat = jnp.tile(-0.5 / (params["spreads"].astype(f32) ** 2), (1, D))
    w_flat = jnp.tile(params["wout"].astype(f32).reshape(1, U), (1, D)) / D
    f_slab = jnp.concatenate(
        [centers_flat, neg_inv_flat, w_flat, jnp.zeros((5, D * U), f32)], axis=0)

    return p_slab, f_slab, params["w2"].astype(f32)


def disjoint_gcn_fuzzy(x_all, adj_all, p_slab, f_slab, w2, *,
                       num_channels, num_blocks=1):
    """x_all: (G, N, 1), adj_all: (G, N, N) dense row-normalized adjacencies.

    G independent disjoint-batch graphs (N = batch * num_channels nodes each).
    num_blocks graphs-groups are processed per pallas grid step (1 for
    v5e/v6e single-TC chips, 2 to feed both v7x TensorCores).
    Returns (G, batch, 1) sigmoid outputs.
    """
    G, N, _ = x_all.shape
    assert G % num_blocks == 0
    Gb = G // num_blocks
    Nb = Gb * N
    batch = N // num_channels
    assert batch * num_channels == N
    Sb = Gb * batch
    Sp = max(8, ((Sb + 7) // 8) * 8)
    D = w2.shape[0]
    DU = f_slab.shape[1]
    U = DU // D
    f32 = jnp.float32

    # Pack Gb graphs per grid step: stacked features + block-diagonal adjacency
    # so the GCN stage is one big (Nb, Nb) @ (Nb, D) matmul per step.
    x_blk = x_all.astype(f32).reshape(num_blocks, Nb, 1)
    adj4 = adj_all.astype(f32).reshape(num_blocks, Gb, N, N)
    eye = jnp.eye(Gb, dtype=f32)
    adj_blk = jnp.einsum("ab,kaij->kaibj", eye, adj4).reshape(num_blocks, Nb, Nb)

    kernel = functools.partial(
        _gcn_fuzzy_kernel, n_nodes_blk=Nb, embed_dim=D, fuzzy_units=U,
        num_channels=num_channels, samples_pad=Sp)

    out_padded = pl.pallas_call(
        kernel,
        out_shape=jax.ShapeDtypeStruct((num_blocks, Sp, 128), f32),
        grid=(num_blocks,),
        in_specs=[
            pl.BlockSpec((None, Nb, 1), lambda k: (k, 0, 0)),      # x
            pl.BlockSpec((None, Nb, Nb), lambda k: (k, 0, 0)),     # adj (blkdiag)
            pl.BlockSpec((D, D), lambda k: (0, 0)),                # w2
            pl.BlockSpec((8, 128), lambda k: (0, 0)),              # p_slab
            pl.BlockSpec((8, DU), lambda k: (0, 0)),               # f_slab
        ],
        out_specs=pl.BlockSpec((None, Sp, 128), lambda k: (k, 0, 0)),
        compiler_params=pltpu.CompilerParams(
            dimension_semantics=("parallel",)),
    )(x_blk, adj_blk, w2, p_slab, f_slab)

    return out_padded[:, :Sb, 0].reshape(G, batch, 1)


def ref_forward(x, adj, params, num_channels):
    """Pure-JAX reference mirroring the PyTorch forward exactly (one graph)."""
    h = jnp.maximum(adj @ (x @ params["w1"] + params["b1"]), 0.0)
    h = jnp.maximum(adj @ (h @ params["w2"] + params["b2"]), 0.0)
    batch = x.shape[0] // num_channels
    agg = h.reshape(batch, num_channels, -1).mean(axis=1)
    diff = agg[:, :, None] - params["centers"][None, :, :]
    mem = jnp.exp(-(diff ** 2) / (2.0 * params["spreads"][None, :, :] ** 2))
    crisp = mem.mean(axis=1)
    logits = crisp @ params["wout"] + params["bout"]
    return jax.nn.sigmoid(logits)


def init_params(key, embed_dim=32, fuzzy_units=32):
    """Deterministic synthetic parameter init (same shapes as the nn.Module)."""
    k = jax.random.split(key, 8)
    D, U = embed_dim, fuzzy_units
    return {
        # Linear(1, D): weight stored transposed as (1, D); bias (1, D)
        "w1": jax.random.uniform(k[0], (1, D), jnp.float32, -1.0, 1.0),
        "b1": jax.random.uniform(k[1], (1, D), jnp.float32, -1.0, 1.0),
        # Linear(D, D): weight stored transposed as (D, D); bias (1, D)
        "w2": jax.random.uniform(k[2], (D, D), jnp.float32, -1.0, 1.0) / jnp.sqrt(D),
        "b2": jax.random.uniform(k[3], (1, D), jnp.float32, -1.0, 1.0) / jnp.sqrt(D),
        # FuzzyLayer params (matching reset_parameters ranges)
        "centers": jax.random.uniform(k[4], (D, U), jnp.float32, -0.1, 0.1),
        "spreads": jax.random.uniform(k[5], (1, U), jnp.float32, 0.1, 1.0),
        # Output Linear(U, 1): weight stored transposed as (U, 1); bias (1, 1)
        "wout": jax.random.uniform(k[6], (U, 1), jnp.float32, -1.0, 1.0) / jnp.sqrt(U),
        "bout": jax.random.uniform(k[7], (1, 1), jnp.float32, -1.0, 1.0) / jnp.sqrt(U),
    }


if __name__ == "__main__":
    EMBED_DIM = 32
    FUZZY_UNITS = 32
    NUM_CHANNELS = 14
    BATCH = 2
    N_NODES = BATCH * NUM_CHANNELS          # 28 nodes per disjoint graph batch
    NUM_GRAPHS = 8                          # independent problems per call

    key = jax.random.PRNGKey(0)
    kx, kadj, kp = jax.random.split(key, 3)

    # G independent problems: node features (G, N, 1), row-normalized adjacency
    x_all = jax.random.normal(kx, (NUM_GRAPHS, N_NODES, 1), jnp.float32)
    adj_raw = jax.random.uniform(kadj, (NUM_GRAPHS, N_NODES, N_NODES), jnp.float32)
    adj_all = adj_raw / jnp.sum(adj_raw, axis=-1, keepdims=True)

    params = init_params(kp, EMBED_DIM, FUZZY_UNITS)
    p_slab, f_slab, w2 = pack_params(params)          # hoisted: built once

    fwd = jax.jit(disjoint_gcn_fuzzy,
                  static_argnames=("num_channels", "num_blocks"))

    # single grid step (v5e / v6e: one TensorCore)
    out1 = jax.block_until_ready(
        fwd(x_all, adj_all, p_slab, f_slab, w2,
            num_channels=NUM_CHANNELS, num_blocks=1))
    # two parallel grid steps (v7x: one per TensorCore)
    out2 = jax.block_until_ready(
        fwd(x_all, adj_all, p_slab, f_slab, w2,
            num_channels=NUM_CHANNELS, num_blocks=2))

    expected = jax.vmap(
        lambda x, a: ref_forward(x, a, params, NUM_CHANNELS))(x_all, adj_all)

    assert out1.shape == (NUM_GRAPHS, BATCH, 1), out1.shape
    assert out2.shape == (NUM_GRAPHS, BATCH, 1), out2.shape
    assert jnp.allclose(out1, expected, atol=1e-4, rtol=1e-4), (out1, expected)
    assert jnp.allclose(out2, expected, atol=1e-4, rtol=1e-4), (out2, expected)

    print("KERNEL_OK")
</pallas_src>

<mosaic_0001>
module attributes {stable_mosaic.version = 11 : i64} {
  func.func @_gcn_fuzzy_kernel(%arg0: i32, %arg1: memref<1x224x1xf32, #tpu.memory_space<vmem>>, %arg2: memref<1x224x224xf32, #tpu.memory_space<vmem>>, %arg3: memref<32x32xf32, #tpu.memory_space<vmem>>, %arg4: memref<8x128xf32, #tpu.memory_space<vmem>>, %arg5: memref<8x1024xf32, #tpu.memory_space<vmem>>, %arg6: memref<1x16x128xf32, #tpu.memory_space<vmem>>) attributes {dimension_semantics = [#tpu.dimension_semantics<parallel>], iteration_bounds = array<i64: 1>, scalar_prefetch = 0 : i64, scratch_operands = 0 : i64, tpu.core_type = #tpu.core_type<tc>, window_params = [{transform_indices = @transform_0, window_bounds = array<i64: 1, 224, 1>}, {transform_indices = @transform_1, window_bounds = array<i64: 1, 224, 224>}, {pipeline_mode = #tpu.pipeline_mode<synchronous>, transform_indices = @transform_2, window_bounds = array<i64: 32, 32>}, {pipeline_mode = #tpu.pipeline_mode<synchronous>, transform_indices = @transform_3, window_bounds = array<i64: 8, 128>}, {pipeline_mode = #tpu.pipeline_mode<synchronous>, transform_indices = @transform_4, window_bounds = array<i64: 8, 1024>}, {transform_indices = @transform_5, window_bounds = array<i64: 1, 16, 128>}]} {
    %c0 = arith.constant 0 : index
    %c0_0 = arith.constant 0 : index
    %c0_1 = arith.constant 0 : index
    %0 = vector.load %arg1[%c0, %c0_0, %c0_1] : memref<1x224x1xf32, #tpu.memory_space<vmem>>, vector<1x224x1xf32>
    %1 = vector.shape_cast %0 : vector<1x224x1xf32> to vector<224x1xf32>
    %c0_2 = arith.constant 0 : index
    %c0_3 = arith.constant 0 : index
    %c0_4 = arith.constant 0 : index
    %2 = vector.load %arg2[%c0_2, %c0_3, %c0_4] : memref<1x224x224xf32, #tpu.memory_space<vmem>>, vector<1x224x224xf32>
    %3 = vector.shape_cast %2 : vector<1x224x224xf32> to vector<224x224xf32>
    %c0_5 = arith.constant 0 : index
    %c0_6 = arith.constant 0 : index
    %4 = vector.load %arg3[%c0_5, %c0_6] : memref<32x32xf32, #tpu.memory_space<vmem>>, vector<32x32xf32>
    %c0_7 = arith.constant 0 : index
    %c0_8 = arith.constant 0 : index
    %5 = vector.load %arg4[%c0_7, %c0_8] : memref<8x128xf32, #tpu.memory_space<vmem>>, vector<1x32xf32>
    %c1 = arith.constant 1 : index
    %c0_9 = arith.constant 0 : index
    %6 = vector.load %arg4[%c1, %c0_9] : memref<8x128xf32, #tpu.memory_space<vmem>>, vector<1x32xf32>
    %c2 = arith.constant 2 : index
    %c0_10 = arith.constant 0 : index
    %7 = vector.load %arg4[%c2, %c0_10] : memref<8x128xf32, #tpu.memory_space<vmem>>, vector<1x32xf32>
    %c3 = arith.constant 3 : index
    %c0_11 = arith.constant 0 : index
    %8 = vector.load %arg4[%c3, %c0_11] : memref<8x128xf32, #tpu.memory_space<vmem>>, vector<1x1xf32>
    %c0_12 = arith.constant 0 : index
    %c0_13 = arith.constant 0 : index
    %9 = vector.load %arg5[%c0_12, %c0_13] : memref<8x1024xf32, #tpu.memory_space<vmem>>, vector<1x1024xf32>
    %c1_14 = arith.constant 1 : index
    %c0_15 = arith.constant 0 : index
    %10 = vector.load %arg5[%c1_14, %c0_15] : memref<8x1024xf32, #tpu.memory_space<vmem>>, vector<1x1024xf32>
    %c2_16 = arith.constant 2 : index
    %c0_17 = arith.constant 0 : index
    %11 = vector.load %arg5[%c2_16, %c0_17] : memref<8x1024xf32, #tpu.memory_space<vmem>>, vector<1x1024xf32>
    %cst = arith.constant dense<0.000000e+00> : vector<224x32xf32>
    %12 = tpu.matmul %1, %5, %cst {dimension_numbers = #tpu.dot_dimension_numbers<[1], [0], [0], [1], [0, 0, 1, 1], [], []>} : vector<224x1xf32>, vector<1x32xf32>, vector<224x32xf32> -> vector<224x32xf32>
    %13 = vector.broadcast %6 : vector<1x32xf32> to vector<224x32xf32>
    %14 = arith.addf %12, %13 : vector<224x32xf32>
    %cst_18 = arith.constant dense<0.000000e+00> : vector<224x32xf32>
    %15 = tpu.matmul %3, %14, %cst_18 {dimension_numbers = #tpu.dot_dimension_numbers<[1], [0], [0], [1], [0, 0, 1, 1], [], []>} : vector<224x224xf32>, vector<224x32xf32>, vector<224x32xf32> -> vector<224x32xf32>
    %cst_19 = arith.constant 0.000000e+00 : f32
    %16 = vector.broadcast %cst_19 : f32 to vector<224x32xf32>
    %17 = arith.maximumf %15, %16 : vector<224x32xf32>
    %cst_20 = arith.constant dense<0.000000e+00> : vector<224x32xf32>
    %18 = tpu.matmul %17, %4, %cst_20 {dimension_numbers = #tpu.dot_dimension_numbers<[1], [0], [0], [1], [0, 0, 1, 1], [], []>} : vector<224x32xf32>, vector<32x32xf32>, vector<224x32xf32> -> vector<224x32xf32>
    %19 = vector.broadcast %7 : vector<1x32xf32> to vector<224x32xf32>
    %20 = arith.addf %18, %19 : vector<224x32xf32>
    %cst_21 = arith.constant dense<0.000000e+00> : vector<224x32xf32>
    %21 = tpu.matmul %3, %20, %cst_21 {dimension_numbers = #tpu.dot_dimension_numbers<[1], [0], [0], [1], [0, 0, 1, 1], [], []>} : vector<224x224xf32>, vector<224x32xf32>, vector<224x32xf32> -> vector<224x32xf32>
    %cst_22 = arith.constant 0.000000e+00 : f32
    %22 = vector.broadcast %cst_22 : f32 to vector<224x32xf32>
    %23 = arith.maximumf %21, %22 : vector<224x32xf32>
    %24 = tpu.iota {dimensions = array<i32: 0>} : vector<16x224xi32>
    %25 = tpu.iota {dimensions = array<i32: 1>} : vector<16x224xi32>
    %c14_i32 = arith.constant 14 : i32
    %26 = vector.broadcast %c14_i32 : i32 to vector<16x224xi32>
    %27 = arith.muli %24, %26 : vector<16x224xi32>
    %28 = arith.cmpi sge, %25, %27 : vector<16x224xi32>
    %c14_i32_23 = arith.constant 14 : i32
    %29 = vector.broadcast %c14_i32_23 : i32 to vector<16x224xi32>
    %30 = arith.addi %27, %29 : vector<16x224xi32>
    %31 = arith.cmpi slt, %25, %30 : vector<16x224xi32>
    %32 = arith.andi %28, %31 : vector<16x224xi1>
    %cst_24 = arith.constant 0.0714285746 : f32
    %cst_25 = arith.constant 0.000000e+00 : f32
    %33 = vector.broadcast %cst_24 : f32 to vector<16x224xf32>
    %34 = vector.broadcast %cst_25 : f32 to vector<16x224xf32>
    %35 = arith.select %32, %33, %34 : vector<16x224xi1>, vector<16x224xf32>
    %cst_26 = arith.constant dense<0.000000e+00> : vector<16x32xf32>
    %36 = tpu.matmul %35, %23, %cst_26 {dimension_numbers = #tpu.dot_dimension_numbers<[1], [0], [0], [1], [0, 0, 1, 1], [], []>} : vector<16x224xf32>, vector<224x32xf32>, vector<16x32xf32> -> vector<16x32xf32>
    %37 = tpu.iota {dimensions = array<i32: 0>} : vector<32x1024xi32>
    %38 = tpu.iota {dimensions = array<i32: 1>} : vector<32x1024xi32>
    %c32_i32 = arith.constant 32 : i32
    %39 = vector.broadcast %c32_i32 : i32 to vector<32x1024xi32>
    %40 = arith.muli %37, %39 : vector<32x1024xi32>
    %41 = arith.cmpi sge, %38, %40 : vector<32x1024xi32>
    %c32_i32_27 = arith.constant 32 : i32
    %42 = vector.broadcast %c32_i32_27 : i32 to vector<32x1024xi32>
    %43 = arith.addi %40, %42 : vector<32x1024xi32>
    %44 = arith.cmpi slt, %38, %43 : vector<32x1024xi32>
    %45 = arith.andi %41, %44 : vector<32x1024xi1>
    %cst_28 = arith.constant 1.000000e+00 : f32
    %cst_29 = arith.constant 0.000000e+00 : f32
    %46 = vector.broadcast %cst_28 : f32 to vector<32x1024xf32>
    %47 = vector.broadcast %cst_29 : f32 to vector<32x1024xf32>
    %48 = arith.select %45, %46, %47 : vector<32x1024xi1>, vector<32x1024xf32>
    %cst_30 = arith.constant dense<0.000000e+00> : vector<16x1024xf32>
    %49 = tpu.matmul %36, %48, %cst_30 {dimension_numbers = #tpu.dot_dimension_numbers<[1], [0], [0], [1], [0, 0, 1, 1], [], []>} : vector<16x32xf32>, vector<32x1024xf32>, vector<16x1024xf32> -> vector<16x1024xf32>
    %50 = vector.broadcast %9 : vector<1x1024xf32> to vector<16x1024xf32>
    %51 = arith.subf %49, %50 : vector<16x1024xf32>
    %52 = arith.mulf %51, %51 : vector<16x1024xf32>
    %53 = vector.broadcast %10 : vector<1x1024xf32> to vector<16x1024xf32>
    %54 = arith.mulf %52, %53 : vector<16x1024xf32>
    %55 = math.exp %54 : vector<16x1024xf32>
    %56 = vector.broadcast %11 : vector<1x1024xf32> to vector<16x1024xf32>
    %57 = arith.mulf %55, %56 : vector<16x1024xf32>
    %cst_31 = arith.constant dense<0.000000e+00> : vector<16xf32>
    %58 = vector.multi_reduction <add>, %57, %cst_31 [1] : vector<16x1024xf32> to vector<16xf32>
    %59 = vector.shape_cast %58 : vector<16xf32> to vector<16x1xf32>
    %60 = vector.broadcast %8 : vector<1x1xf32> to vector<16x1xf32>
    %61 = arith.addf %59, %60 : vector<16x1xf32>
    %cst_32 = arith.constant 0.000000e+00 : f32
    %62 = vector.broadcast %cst_32 : f32 to vector<16x1xf32>
    %63 = arith.subf %62, %61 : vector<16x1xf32>
    %64 = math.exp %63 : vector<16x1xf32>
    %cst_33 = arith.constant 1.000000e+00 : f32
    %65 = vector.broadcast %cst_33 : f32 to vector<16x1xf32>
    %66 = arith.addf %65, %64 : vector<16x1xf32>
    %cst_34 = arith.constant 1.000000e+00 : f32
    %67 = vector.broadcast %cst_34 : f32 to vector<16x1xf32>
    %68 = arith.divf %67, %66 : vector<16x1xf32>
    %69 = vector.shape_cast %68 : vector<16x1xf32> to vector<16x1xf32>
    %70 = vector.broadcast %69 : vector<16x1xf32> to vector<16x128xf32>
    %c0_35 = arith.constant 0 : index
    %c0_36 = arith.constant 0 : index
    %c0_37 = arith.constant 0 : index
    %71 = vector.load %arg6[%c0_35, %c0_36, %c0_37] : memref<1x16x128xf32, #tpu.memory_space<vmem>>, vector<1x16x128xf32>
    %72 = vector.shape_cast %71 : vector<1x16x128xf32> to vector<16x128xf32>
    %73 = vector.shape_cast %70 : vector<16x128xf32> to vector<1x16x128xf32>
    tpu.vector_store %arg6[%c0_35, %c0_36, %c0_37], %73 {strides = array<i32>} : memref<1x16x128xf32, #tpu.memory_space<vmem>>, vector<1x16x128xf32>,
    return
  }
  func.func @transform_0(%arg0: i32) -> (i32, i32, i32) {
    %c0_i32 = arith.constant 0 : i32
    %c0_i32_0 = arith.constant 0 : i32
    %c0_i32_1 = arith.constant 0 : i32
    return %arg0, %c0_i32, %c0_i32_0 : i32, i32, i32
  }
  func.func @transform_1(%arg0: i32) -> (i32, i32, i32) {
    %c0_i32 = arith.constant 0 : i32
    %c0_i32_0 = arith.constant 0 : i32
    %c0_i32_1 = arith.constant 0 : i32
    return %arg0, %c0_i32, %c0_i32_0 : i32, i32, i32
  }
  func.func @transform_2(%arg0: i32) -> (i32, i32) {
    %c0_i32 = arith.constant 0 : i32
    %c0_i32_0 = arith.constant 0 : i32
    %c0_i32_1 = arith.constant 0 : i32
    return %c0_i32, %c0_i32_0 : i32, i32
  }
  func.func @transform_3(%arg0: i32) -> (i32, i32) {
    %c0_i32 = arith.constant 0 : i32
    %c0_i32_0 = arith.constant 0 : i32
    %c0_i32_1 = arith.constant 0 : i32
    return %c0_i32, %c0_i32_0 : i32, i32
  }
  func.func @transform_4(%arg0: i32) -> (i32, i32) {
    %c0_i32 = arith.constant 0 : i32
    %c0_i32_0 = arith.constant 0 : i32
    %c0_i32_1 = arith.constant 0 : i32
    return %c0_i32, %c0_i32_0 : i32, i32
  }
  func.func @transform_5(%arg0: i32) -> (i32, i32, i32) {
    %c0_i32 = arith.constant 0 : i32
    %c0_i32_0 = arith.constant 0 : i32
    %c0_i32_1 = arith.constant 0 : i32
    return %arg0, %c0_i32, %c0_i32_0 : i32, i32, i32
  }
}

</mosaic_0001>

<llo_original>
// kernel: squeeze.1
$region0: #{squeeze.1}
  %s0 = inlined_call_operand.vmem [shape: f32[16], index: 0, kind: input, shape index: {}]
  %s1 = inlined_call_operand.vmem [shape: f32[8,2,1], index: 1, kind: output, shape index: {}]
  $region1: #{squeeze.1} parent=0
    #allocation0 [shape = 'u8[4096]{0}', space=vmem, size = 0x1000, scoped, tag = 'scoped mem for input reshape']
    %s3 = sshllo.u32 0, 1
    %v4 = vld [vmem:[%s0] sm:%s3]
    %5 = vst [vmem:[#allocation0] sm:%s3] %v4
    %v6 = vld [vmem:[#allocation0] sm:$0x1]
    %vm7 = vcmask 15360
    %8 = vst.msk [vmem:[%s1] sm:$0x1] %vm7, %v6
    %v9 = vld [vmem:[#allocation0] sm:$0x1]
    %10 = vrot.lane.b32.xlu0 %v9, 126
    %v11 = vpop.permute.xlu0 %10
    %vm12 = vcmask 15360
    %s13 = scalar_lea.vmem %s1, 1
    %14 = vst.msk [vmem:[%s13] sm:$0x1] %vm12, %v11
    %v15 = vld [vmem:[#allocation0] sm:$0x1]
    %16 = vrot.lane.b32.xlu0 %v15, 124
    %v17 = vpop.permute.xlu0 %16
    %vm18 = vcmask 15360
    %s19 = scalar_lea.vmem %s1, 2
    %20 = vst.msk [vmem:[%s19] sm:$0x1] %vm18, %v17
    %v21 = vld [vmem:[#allocation0] sm:$0x1]
    %22 = vrot.lane.b32.xlu0 %v21, 122
    %v23 = vpop.permute.xlu0 %22
    %vm24 = vcmask 15360
    %s25 = scalar_lea.vmem %s1, 3
    %26 = vst.msk [vmem:[%s25] sm:$0x1] %vm24, %v23
    %v27 = vld [vmem:[#allocation0] sm:$0x1]
    %28 = vrot.lane.b32.xlu0 %v27, 120
    %v29 = vpop.permute.xlu0 %28
    %vm30 = vcmask 15360
    %s31 = scalar_lea.vmem %s1, 4
    %32 = vst.msk [vmem:[%s31] sm:$0x1] %vm30, %v29
    %v33 = vld [vmem:[#allocation0] sm:$0x1]
    %34 = vrot.lane.b32.xlu0 %v33, 118
    %v35 = vpop.permute.xlu0 %34
    %vm36 = vcmask 15360
    %s37 = scalar_lea.vmem %s1, 5
    %38 = vst.msk [vmem:[%s37] sm:$0x1] %vm36, %v35
    %v39 = vld [vmem:[#allocation0] sm:$0x1]
    %40 = vrot.lane.b32.xlu0 %v39, 116
    %v41 = vpop.permute.xlu0 %40
    %vm42 = vcmask 15360
    %s43 = scalar_lea.vmem %s1, 6
    %44 = vst.msk [vmem:[%s43] sm:$0x1] %vm42, %v41
    %v45 = vld [vmem:[#allocation0] sm:$0x1]
    %46 = vrot.lane.b32.xlu0 %v45, 114
    %v47 = vpop.permute.xlu0 %46
    %vm48 = vcmask 15360
    %s49 = scalar_lea.vmem %s1, 7
    %50 = vst.msk [vmem:[%s49] sm:$0x1] %vm48, %v47

// kernel: disjoint_gcn_fuzzy.1
$region0: #{disjoint_gcn_fuzzy.1}
  #allocation0 [shape = 'u32[]', space=smem, size = 0x4, offset = 0x4, fixed_abs, tag = 'smem constant byte address 0x4 - core index']
  #allocation1 [shape = 'u32[144,128]{1,0:T(1,128)}', space=vmem, size = 0x12000, scoped, tag = 'internal scratch']
  %s0 = inlined_call_operand.vmem [shape: f32[1,224,1], index: 0, kind: input, shape index: {}]
  %s1 = inlined_call_operand.vmem [shape: f32[1,224,224], index: 1, kind: input, shape index: {}]
  %s2 = inlined_call_operand.vmem [shape: f32[32,32], index: 2, kind: input, shape index: {}]
  %s3 = inlined_call_operand.vmem [shape: f32[8,128], index: 3, kind: input, shape index: {}]
  %s4 = inlined_call_operand.vmem [shape: f32[8,1024], index: 4, kind: input, shape index: {}]
  %s5 = inlined_call_operand.vmem [shape: f32[1,16,128], index: 5, kind: output, shape index: {}]
  %s6 = sld [smem:[#allocation0]]
  $region30: #{disjoint_gcn_fuzzy.1} parent=0
    _
  %s8 = ssub.s32 1, %s6
  %s9 = scalar_select 0, %s8, %s6
  // Predicated region
  $region2: #{disjoint_gcn_fuzzy.1} parent=0 // pred_check
    _
  $region3: #{disjoint_gcn_fuzzy.1} parent=0 // pred_check_branch
    %11 = sbr.rel (0) target = $region5
  $region4: #{disjoint_gcn_fuzzy.1} parent=0 // pred_region
    _
  $region5: #{disjoint_gcn_fuzzy.1} parent=0 // pred_fallthru
    _
  // Predicated region
  $region6: #{disjoint_gcn_fuzzy.1} parent=0 // pred_check
    _
  $region7: #{disjoint_gcn_fuzzy.1} parent=0 // pred_check_branch
    %13 = sbr.rel (0) target = $region9
  $region8: #{disjoint_gcn_fuzzy.1} parent=0 // pred_region
    _
  $region9: #{disjoint_gcn_fuzzy.1} parent=0 // pred_fallthru
    _
  // Predicated region
  $region10: #{disjoint_gcn_fuzzy.1} parent=0 // pred_check
    _
  $region11: #{disjoint_gcn_fuzzy.1} parent=0 // pred_check_branch
    %15 = sbr.rel (0) target = $region13
  $region12: #{disjoint_gcn_fuzzy.1} parent=0 // pred_region
    _
  $region13: #{disjoint_gcn_fuzzy.1} parent=0 // pred_fallthru
    _
  // Predicated region
  $region14: #{disjoint_gcn_fuzzy.1} parent=0 // pred_check
    _
  $region15: #{disjoint_gcn_fuzzy.1} parent=0 // pred_check_branch
    %17 = sbr.rel (0) target = $region17
  $region16: #{disjoint_gcn_fuzzy.1} parent=0 // pred_region
    _
  $region17: #{disjoint_gcn_fuzzy.1} parent=0 // pred_fallthru
    _
  // Predicated region
  $region18: #{disjoint_gcn_fuzzy.1} parent=0 // pred_check
    _
  $region19: #{disjoint_gcn_fuzzy.1} parent=0 // pred_check_branch
    %19 = sbr.rel (0) target = $region21
  $region20: #{disjoint_gcn_fuzzy.1} parent=0 // pred_region
    _
  $region21: #{disjoint_gcn_fuzzy.1} parent=0 // pred_fallthru
    _
  %v20 = vld [vmem:[%s0] sm:$0xff]
  %v21 = vld [vmem:[%s0 + $0x8] sm:$0xff]
  %v22 = vld [vmem:[%s0 + $0x10] sm:$0xff]
  %v23 = vld [vmem:[%s0 + $0x18] sm:$0xff]
  %v24 = vld [vmem:[%s0 + $0x20] sm:$0xff]
  %v25 = vld [vmem:[%s0 + $0x28] sm:$0xff]
  %v26 = vld [vmem:[%s0 + $0x30] sm:$0xff]
  %v27 = vld [vmem:[%s0 + $0x38] sm:$0xff]
  %v28 = vld [vmem:[%s0 + $0x40] sm:$0xff]
  %v29 = vld [vmem:[%s0 + $0x48] sm:$0xff]
  %v30 = vld [vmem:[%s0 + $0x50] sm:$0xff]
  %v31 = vld [vmem:[%s0 + $0x58] sm:$0xff]
  %v32 = vld [vmem:[%s0 + $0x60] sm:$0xff]
  %v33 = vld [vmem:[%s0 + $0x68] sm:$0xff]
  %v34 = vld [vmem:[%s0 + $0x70] sm:$0xff]
  %v35 = vld [vmem:[%s0 + $0x78] sm:$0xff]
  %v36 = vld [vmem:[%s0 + $0x80] sm:$0xff]
  %v37 = vld [vmem:[%s0 + $0x88] sm:$0xff]
  %v38 = vld [vmem:[%s0 + $0x90] sm:$0xff]
  %v39 = vld [vmem:[%s0 + $0x98] sm:$0xff]
  %v40 = vld [vmem:[%s0 + $0xa0] sm:$0xff]
  %v41 = vld [vmem:[%s0 + $0xa8] sm:$0xff]
  %v42 = vld [vmem:[%s0 + $0xb0] sm:$0xff]
  %v43 = vld [vmem:[%s0 + $0xb8] sm:$0xff]
  %v44 = vld [vmem:[%s0 + $0xc0] sm:$0xff]
  %v45 = vld [vmem:[%s0 + $0xc8] sm:$0xff]
  %v46 = vld [vmem:[%s0 + $0xd0] sm:$0xff]
  %v47 = vld [vmem:[%s0 + $0xd8] sm:$0xff]
  %v48 = vld [vmem:[%s1] sm:$0xff]
  %v49 = vld [vmem:[%s1 + $0x8] sm:$0xff]
  %v50 = vld [vmem:[%s1 + $0x10] sm:$0xff]
  %v51 = vld [vmem:[%s1 + $0x18] sm:$0xff]
  %v52 = vld [vmem:[%s1 + $0x20] sm:$0xff]
  %v53 = vld [vmem:[%s1 + $0x28] sm:$0xff]
  %v54 = vld [vmem:[%s1 + $0x30] sm:$0xff]
  %v55 = vld [vmem:[%s1 + $0x38] sm:$0xff]
  %v56 = vld [vmem:[%s1 + $0x40] sm:$0xff]
  %v57 = vld [vmem:[%s1 + $0x48] sm:$0xff]
  %v58 = vld [vmem:[%s1 + $0x50] sm:$0xff]
  %v59 = vld [vmem:[%s1 + $0x58] sm:$0xff]
  %v60 = vld [vmem:[%s1 + $0x60] sm:$0xff]
  %v61 = vld [vmem:[%s1 + $0x68] sm:$0xff]
  %v62 = vld [vmem:[%s1 + $0x70] sm:$0xff]
  %v63 = vld [vmem:[%s1 + $0x78] sm:$0xff]
  %v64 = vld [vmem:[%s1 + $0x80] sm:$0xff]
  %v65 = vld [vmem:[%s1 + $0x88] sm:$0xff]
  %v66 = vld [vmem:[%s1 + $0x90] sm:$0xff]
  %v67 = vld [vmem:[%s1 + $0x98] sm:$0xff]
  %v68 = vld [vmem:[%s1 + $0xa0] sm:$0xff]
  %v69 = vld [vmem:[%s1 + $0xa8] sm:$0xff]
  %v70 = vld [vmem:[%s1 + $0xb0] sm:$0xff]
  %v71 = vld [vmem:[%s1 + $0xb8] sm:$0xff]
  %v72 = vld [vmem:[%s1 + $0xc0] sm:$0xff]
  %v73 = vld [vmem:[%s1 + $0xc8] sm:$0xff]
  %v74 = vld [vmem:[%s1 + $0xd0] sm:$0xff]
  %v75 = vld [vmem:[%s1 + $0xd8] sm:$0xff]
  %v76 = vld [vmem:[%s1 + $0xe0] sm:$0xff]
  %v77 = vld [vmem:[%s1 + $0xe8] sm:$0xff]
  %v78 = vld [vmem:[%s1 + $0xf0] sm:$0xff]
  %v79 = vld [vmem:[%s1 + $0xf8] sm:$0xff]
  %v80 = vld [vmem:[%s1 + $0x100] sm:$0xff]
  %v81 = vld [vmem:[%s1 + $0x108] sm:$0xff]
  %v82 = vld [vmem:[%s1 + $0x110] sm:$0xff]
  %v83 = vld [vmem:[%s1 + $0x118] sm:$0xff]
  %v84 = vld [vmem:[%s1 + $0x120] sm:$0xff]
  %v85 = vld [vmem:[%s1 + $0x128] sm:$0xff]
  %v86 = vld [vmem:[%s1 + $0x130] sm:$0xff]
  %v87 = vld [vmem:[%s1 + $0x138] sm:$0xff]
  %v88 = vld [vmem:[%s1 + $0x140] sm:$0xff]
  %v89 = vld [vmem:[%s1 + $0x148] sm:$0xff]
  %v90 = vld [vmem:[%s1 + $0x150] sm:$0xff]
  %v91 = vld [vmem:[%s1 + $0x158] sm:$0xff]
  %v92 = vld [vmem:[%s1 + $0x160] sm:$0xff]
  %v93 = vld [vmem:[%s1 + $0x168] sm:$0xff]
  %v94 = vld [vmem:[%s1 + $0x170] sm:$0xff]
  %v95 = vld [vmem:[%s1 + $0x178] sm:$0xff]
  %v96 = vld [vmem:[%s1 + $0x180] sm:$0xff]
  %v97 = vld [vmem:[%s1 + $0x188] sm:$0xff]
  %v98 = vld [vmem:[%s1 + $0x190] sm:$0xff]
  %v99 = vld [vmem:[%s1 + $0x198] sm:$0xff]
  %v100 = vld [vmem:[%s1 + $0x1a0] sm:$0xff]
  %v101 = vld [vmem:[%s1 + $0x1a8] sm:$0xff]
  %v102 = vld [vmem:[%s1 + $0x1b0] sm:$0xff]
  %v103 = vld [vmem:[%s1 + $0x1b8] sm:$0xff]
  %v104 = vld [vmem:[%s2] sm:$0xff]
  %v105 = vld [vmem:[%s2 + $0x8] sm:$0xff]
  %v106 = vld [vmem:[%s2 + $0x10] sm:$0xff]
  %v107 = vld [vmem:[%s2 + $0x18] sm:$0xff]
  %v108 = vld [vmem:[%s3] sm:$0x1]
  %v109 = vld [vmem:[%s3 + $0x1] sm:$0x1]
  %v110 = vld [vmem:[%s3 + $0x2] sm:$0x1]
  %v111 = vld [vmem:[%s3 + $0x3] sm:$0x1]
  %v112 = vld [vmem:[%s4] ss:$8 sm:$0xf]
  %v113 = vld [vmem:[%s4] ss:$8 sm:$0xf0]
  %v114 = vor.u32 %v112, %v113
  %s115 = scalar_lea.vmem %s4, 1
  %v116 = vld [vmem:[%s115] ss:$8 sm:$0xf]
  %v117 = vld [vmem:[%s115] ss:$8 sm:$0xf0]
  %v118 = vor.u32 %v116, %v117
  %s119 = scalar_lea.vmem %s4, 2
  %v120 = vld [vmem:[%s119] ss:$8 sm:$0xf]
  %v121 = vld [vmem:[%s119] ss:$8 sm:$0xf0]
  %v122 = vor.u32 %v120, %v121
  %v123 = vlaneseq
  %v124 = vshrl.u32 %v123, 7
  %v125 = vsub.s32 0, %v124
  %v126 = vrot.slane %v109, %v125
  %vm127 = vcmask 7168
  %v129 = vsel %vm127, %v20, 0
  %v132 = vsel %vm127, %v21, 0
  %v135 = vsel %vm127, %v22, 0
  %v138 = vsel %vm127, %v23, 0
  %v141 = vsel %vm127, %v24, 0
  %v144 = vsel %vm127, %v25, 0
  %v147 = vsel %vm127, %v26, 0
  %v150 = vsel %vm127, %v27, 0
  %v153 = vsel %vm127, %v28, 0
  %v156 = vsel %vm127, %v29, 0
  %v159 = vsel %vm127, %v30, 0
  %v162 = vsel %vm127, %v31, 0
  %v165 = vsel %vm127, %v32, 0
  %v168 = vsel %vm127, %v33, 0
  %v171 = vsel %vm127, %v34, 0
  %v174 = vsel %vm127, %v35, 0
  %v177 = vsel %vm127, %v36, 0
  %v180 = vsel %vm127, %v37, 0
  %v183 = vsel %vm127, %v38, 0
  %v186 = vsel %vm127, %v39, 0
  %v189 = vsel %vm127, %v40, 0
  %v192 = vsel %vm127, %v41, 0
  %v195 = vsel %vm127, %v42, 0
  %v198 = vsel %vm127, %v43, 0
  %v201 = vsel %vm127, %v44, 0
  %v204 = vsel %vm127, %v45, 0
  %v207 = vsel %vm127, %v46, 0
  %v210 = vsel %vm127, %v47, 0
  %vm212 = vcmask 1040384
  %v214 = vsel %vm212, %v108, 0
  %216 = vmatprep.subr.mxu0 0.0
  %217 = vmatpush1.msra.mxu0 %v214
  %218 = vmatprep.subr.mxu0 0.0
  %219 = vmatpush1.msra.mxu0 0.0
  %220 = vmatprep.subr.mxu0 0.0
  %221 = vmatpush1.msra.mxu0 0.0
  %222 = vmatprep.subr.mxu0 0.0
  %223 = vmatpush1.msra.mxu0 0.0
  %224 = vmatprep.subr.mxu0 0.0
  %225 = vmatpush1.msra.mxu0 0.0
  %226 = vmatprep.subr.mxu0 0.0
  %227 = vmatpush1.msra.mxu0 0.0
  %228 = vmatprep.subr.mxu0 0.0
  %229 = vmatpush1.msra.mxu0 0.0
  %230 = vmatprep.subr.mxu0 0.0
  %231 = vmatpush1.msra.mxu0 0.0
  %232 = vmatprep.subr.mxu0 0.0
  %233 = vmatpush1.msra.mxu0 0.0
  %234 = vmatprep.subr.mxu0 0.0
  %235 = vmatpush1.msra.mxu0 0.0
  %236 = vmatprep.subr.mxu0 0.0
  %237 = vmatpush1.msra.mxu0 0.0
  %238 = vmatprep.subr.mxu0 0.0
  %239 = vmatpush1.msra.mxu0 0.0
  %240 = vmatprep.subr.mxu0 0.0
  %241 = vmatpush1.msra.mxu0 0.0
  %242 = vmatprep.subr.mxu0 0.0
  %243 = vmatpush1.msra.mxu0 0.0
  %244 = vmatprep.subr.mxu0 0.0
  %245 = vmatpush1.msra.mxu0 0.0
  %246 = vmatprep.subr.mxu0 0.0
  %247 = vmatpush1.msra.mxu0 0.0
  %248 = vmatprep.subr.mxu0 0.0
  %249 = vmatpush1.msra.mxu0 0.0
  %250 = vmatprep.subr.mxu0 0.0
  %251 = vmatpush1.msra.mxu0 0.0
  %252 = vmatprep.subr.mxu0 0.0
  %253 = vmatpush1.msra.mxu0 0.0
  %254 = vmatprep.subr.mxu0 0.0
  %255 = vmatpush1.msra.mxu0 0.0
  %256 = vmatprep.subr.mxu0 0.0
  %257 = vmatpush1.msra.mxu0 0.0
  %258 = vmatprep.subr.mxu0 0.0
  %259 = vmatpush1.msra.mxu0 0.0
  %260 = vmatprep.subr.mxu0 0.0
  %261 = vmatpush1.msra.mxu0 0.0
  %262 = vmatprep.subr.mxu0 0.0
  %263 = vmatpush1.msra.mxu0 0.0
  %264 = vmatprep.subr.mxu0 0.0
  %265 = vmatpush1.msra.mxu0 0.0
  %266 = vmatprep.subr.mxu0 0.0
  %267 = vmatpush1.msra.mxu0 0.0
  %268 = vmatprep.subr.mxu0 0.0
  %269 = vmatpush1.msra.mxu0 0.0
  %270 = vmatprep.subr.mxu0 0.0
  %271 = vmatpush1.msra.mxu0 0.0
  %272 = vmatprep.subr.mxu0 0.0
  %273 = vmatpush1.msra.mxu0 0.0
  %274 = vmatprep.subr.mxu0 0.0
  %275 = vmatpush1.msra.mxu0 0.0
  %276 = vmatprep.subr.mxu0 0.0
  %277 = vmatpush1.msra.mxu0 0.0
  %278 = vmatprep.subr.mxu0 0.0
  %279 = vmatpush1.msra.mxu0 0.0
  %280 = vmatprep.mubr.f32.mxu0 0.0
  %281 = vmatmul.mubr.f32.gmra.mrb[0].mxu0 %v129
  %v282 = vpop.f32.mrb[0].mxu0
  %v283 = vadd.f32 %v126, %v282
  %v284 = vpop.f32.mrb[0].mxu0
  %285 = vmatprep.mubr.f32.mxu0 0.0
  %286 = vmatmul.mubr.f32.gmra.mrb[0].mxu0 %v132
  %v287 = vpop.f32.mrb[0].mxu0
  %v288 = vadd.f32 %v126, %v287
  %v289 = vpop.f32.mrb[0].mxu0
  %290 = vmatprep.mubr.f32.mxu0 0.0
  %291 = vmatmul.mubr.f32.gmra.mrb[0].mxu0 %v135
  %v292 = vpop.f32.mrb[0].mxu0
  %v293 = vadd.f32 %v126, %v292
  %v294 = vpop.f32.mrb[0].mxu0
  %295 = vmatprep.mubr.f32.mxu0 0.0
  %296 = vmatmul.mubr.f32.gmra.mrb[0].mxu0 %v138
  %v297 = vpop.f32.mrb[0].mxu0
  %v298 = vadd.f32 %v126, %v297
  %v299 = vpop.f32.mrb[0].mxu0
  %300 = vmatprep.mubr.f32.mxu0 0.0
  %301 = vmatmul.mubr.f32.gmra.mrb[0].mxu0 %v141
  %v302 = vpop.f32.mrb[0].mxu0
  %v303 = vadd.f32 %v126, %v302
  %v304 = vpop.f32.mrb[0].mxu0
  %305 = vmatprep.mubr.f32.mxu0 0.0
  %306 = vmatmul.mubr.f32.gmra.mrb[0].mxu0 %v144
  %v307 = vpop.f32.mrb[0].mxu0
  %v308 = vadd.f32 %v126, %v307
  %v309 = vpop.f32.mrb[0].mxu0
  %310 = vmatprep.mubr.f32.mxu0 0.0
  %311 = vmatmul.mubr.f32.gmra.mrb[0].mxu0 %v147
  %v312 = vpop.f32.mrb[0].mxu0
  %v313 = vadd.f32 %v126, %v312
  %v314 = vpop.f32.mrb[0].mxu0
  %315 = vmatprep.mubr.f32.mxu0 0.0
  %316 = vmatmul.mubr.f32.gmra.mrb[0].mxu0 %v150
  %v317 = vpop.f32.mrb[0].mxu0
  %v318 = vadd.f32 %v126, %v317
  %v319 = vpop.f32.mrb[0].mxu0
  %320 = vmatprep.mubr.f32.mxu0 0.0
  %321 = vmatmul.mubr.f32.gmra.mrb[0].mxu0 %v153
  %v322 = vpop.f32.mrb[0].mxu0
  %v323 = vadd.f32 %v126, %v322
  %v324 = vpop.f32.mrb[0].mxu0
  %325 = vmatprep.mubr.f32.mxu0 0.0
  %326 = vmatmul.mubr.f32.gmra.mrb[0].mxu0 %v156
  %v327 = vpop.f32.mrb[0].mxu0
  %v328 = vadd.f32 %v126, %v327
  %v329 = vpop.f32.mrb[0].mxu0
  %330 = vmatprep.mubr.f32.mxu0 0.0
  %331 = vmatmul.mubr.f32.gmra.mrb[0].mxu0 %v159
  %v332 = vpop.f32.mrb[0].mxu0
  %v333 = vadd.f32 %v126, %v332
  %v334 = vpop.f32.mrb[0].mxu0
  %335 = vmatprep.mubr.f32.mxu0 0.0
  %336 = vmatmul.mubr.f32.gmra.mrb[0].mxu0 %v162
  %v337 = vpop.f32.mrb[0].mxu0
  %v338 = vadd.f32 %v126, %v337
  %v339 = vpop.f32.mrb[0].mxu0
  %340 = vmatprep.mubr.f32.mxu0 0.0
  %341 = vmatmul.mubr.f32.gmra.mrb[0].mxu0 %v165
  %v342 = vpop.f32.mrb[0].mxu0
  %v343 = vadd.f32 %v126, %v342
  %v344 = vpop.f32.mrb[0].mxu0
  %345 = vmatprep.mubr.f32.mxu0 0.0
  %346 = vmatmul.mubr.f32.gmra.mrb[0].mxu0 %v168
  %v347 = vpop.f32.mrb[0].mxu0
  %v348 = vadd.f32 %v126, %v347
  %v349 = vpop.f32.mrb[0].mxu0
  %350 = vmatprep.mubr.f32.mxu0 0.0
  %351 = vmatmul.mubr.f32.gmra.mrb[0].mxu0 %v171
  %v352 = vpop.f32.mrb[0].mxu0
  %v353 = vadd.f32 %v126, %v352
  %v354 = vpop.f32.mrb[0].mxu0
  %355 = vmatprep.mubr.f32.mxu0 0.0
  %356 = vmatmul.mubr.f32.gmra.mrb[0].mxu0 %v174
  %v357 = vpop.f32.mrb[0].mxu0
  %v358 = vadd.f32 %v126, %v357
  %v359 = vpop.f32.mrb[0].mxu0
  %360 = vmatprep.mubr.f32.mxu0 0.0
  %361 = vmatmul.mubr.f32.gmra.mrb[0].mxu0 %v177
  %v362 = vpop.f32.mrb[0].mxu0
  %v363 = vadd.f32 %v126, %v362
  %v364 = vpop.f32.mrb[0].mxu0
  %365 = vmatprep.mubr.f32.mxu0 0.0
  %366 = vmatmul.mubr.f32.gmra.mrb[0].mxu0 %v180
  %v367 = vpop.f32.mrb[0].mxu0
  %v368 = vadd.f32 %v126, %v367
  %v369 = vpop.f32.mrb[0].mxu0
  %370 = vmatprep.mubr.f32.mxu0 0.0
  %371 = vmatmul.mubr.f32.gmra.mrb[0].mxu0 %v183
  %v372 = vpop.f32.mrb[0].mxu0
  %v373 = vadd.f32 %v126, %v372
  %v374 = vpop.f32.mrb[0].mxu0
  %375 = vmatprep.mubr.f32.mxu0 0.0
  %376 = vmatmul.mubr.f32.gmra.mrb[0].mxu0 %v186
  %v377 = vpop.f32.mrb[0].mxu0
  %v378 = vadd.f32 %v126, %v377
  %v379 = vpop.f32.mrb[0].mxu0
  %380 = vmatprep.mubr.f32.mxu0 0.0
  %381 = vmatmul.mubr.f32.gmra.mrb[0].mxu0 %v189
  %v382 = vpop.f32.mrb[0].mxu0
  %v383 = vadd.f32 %v126, %v382
  %v384 = vpop.f32.mrb[0].mxu0
  %385 = vmatprep.mubr.f32.mxu0 0.0
  %386 = vmatmul.mubr.f32.gmra.mrb[0].mxu0 %v192
  %v387 = vpop.f32.mrb[0].mxu0
  %v388 = vadd.f32 %v126, %v387
  %v389 = vpop.f32.mrb[0].mxu0
  %390 = vmatprep.mubr.f32.mxu0 0.0
  %391 = vmatmul.mubr.f32.gmra.mrb[0].mxu0 %v195
  %v392 = vpop.f32.mrb[0].mxu0
  %v393 = vadd.f32 %v126, %v392
  %v394 = vpop.f32.mrb[0].mxu0
  %395 = vmatprep.mubr.f32.mxu0 0.0
  %396 = vmatmul.mubr.f32.gmra.mrb[0].mxu0 %v198
  %v397 = vpop.f32.mrb[0].mxu0
  %v398 = vadd.f32 %v126, %v397
  %v399 = vpop.f32.mrb[0].mxu0
  %400 = vmatprep.mubr.f32.mxu0 0.0
  %401 = vmatmul.mubr.f32.gmra.mrb[0].mxu0 %v201
  %v402 = vpop.f32.mrb[0].mxu0
  %v403 = vadd.f32 %v126, %v402
  %v404 = vpop.f32.mrb[0].mxu0
  %405 = vmatprep.mubr.f32.mxu0 0.0
  %406 = vmatmul.mubr.f32.gmra.mrb[0].mxu0 %v204
  %v407 = vpop.f32.mrb[0].mxu0
  %v408 = vadd.f32 %v126, %v407
  %v409 = vpop.f32.mrb[0].mxu0
  %410 = vmatprep.mubr.f32.mxu0 0.0
  %411 = vmatmul.mubr.f32.gmra.mrb[0].mxu0 %v207
  %v412 = vpop.f32.mrb[0].mxu0
  %v413 = vadd.f32 %v126, %v412
  %v414 = vpop.f32.mrb[0].mxu0
  %415 = vmatprep.mubr.f32.mxu0 0.0
  %416 = vmatmul.mubr.f32.gmra.mrb[0].mxu0 %v210
  %v417 = vpop.f32.mrb[0].mxu0
  %v418 = vadd.f32 %v126, %v417
  %v419 = vpop.f32.mrb[0].mxu0
  %420 = vdwg.mxu0
  %vm421 = vcmask 785408
  %v423 = vsel %vm421, %v49, 0
  %v426 = vsel %vm421, %v51, 0
  %v429 = vsel %vm421, %v53, 0
  %v432 = vsel %vm421, %v55, 0
  %v435 = vsel %vm421, %v57, 0
  %v438 = vsel %vm421, %v59, 0
  %v441 = vsel %vm421, %v61, 0
  %v444 = vsel %vm421, %v63, 0
  %v447 = vsel %vm421, %v65, 0
  %v450 = vsel %vm421, %v67, 0
  %v453 = vsel %vm421, %v69, 0
  %v456 = vsel %vm421, %v71, 0
  %v459 = vsel %vm421, %v73, 0
  %v462 = vsel %vm421, %v75, 0
  %v465 = vsel %vm421, %v77, 0
  %v468 = vsel %vm421, %v79, 0
  %v471 = vsel %vm421, %v81, 0
  %v474 = vsel %vm421, %v83, 0
  %v477 = vsel %vm421, %v85, 0
  %v480 = vsel %vm421, %v87, 0
  %v483 = vsel %vm421, %v89, 0
  %v486 = vsel %vm421, %v91, 0
  %v489 = vsel %vm421, %v93, 0
  %v492 = vsel %vm421, %v95, 0
  %v495 = vsel %vm421, %v97, 0
  %v498 = vsel %vm421, %v99, 0
  %v501 = vsel %vm421, %v101, 0
  %v504 = vsel %vm421, %v103, 0
  %506 = vmatprep.subr.mxu0 0.0
  %507 = vmatpush1.msra.mxu0 %v283
  %508 = vmatprep.subr.mxu0 0.0
  %509 = vmatpush1.msra.mxu0 %v288
  %510 = vmatprep.subr.mxu0 0.0
  %511 = vmatpush1.msra.mxu0 %v293
  %512 = vmatprep.subr.mxu0 0.0
  %513 = vmatpush1.msra.mxu0 %v298
  %514 = vmatprep.subr.mxu0 0.0
  %515 = vmatpush1.msra.mxu0 %v303
  %516 = vmatprep.subr.mxu0 0.0
  %517 = vmatpush1.msra.mxu0 %v308
  %518 = vmatprep.subr.mxu0 0.0
  %519 = vmatpush1.msra.mxu0 %v313
  %520 = vmatprep.subr.mxu0 0.0
  %521 = vmatpush1.msra.mxu0 %v318
  %522 = vmatprep.subr.mxu0 0.0
  %523 = vmatpush1.msra.mxu0 %v323
  %524 = vmatprep.subr.mxu0 0.0
  %525 = vmatpush1.msra.mxu0 %v328
  %526 = vmatprep.subr.mxu0 0.0
  %527 = vmatpush1.msra.mxu0 %v333
  %528 = vmatprep.subr.mxu0 0.0
  %529 = vmatpush1.msra.mxu0 %v338
  %530 = vmatprep.subr.mxu0 0.0
  %531 = vmatpush1.msra.mxu0 %v343
  %532 = vmatprep.subr.mxu0 0.0
  %533 = vmatpush1.msra.mxu0 %v348
  %534 = vmatprep.subr.mxu0 0.0
  %535 = vmatpush1.msra.mxu0 %v353
  %536 = vmatprep.subr.mxu0 0.0
  %537 = vmatpush1.msra.mxu0 %v358
  %538 = vmatprep.subr.mxu0 0.0
  %539 = vmatpush1.msra.mxu0 %v363
  %540 = vmatprep.subr.mxu0 0.0
  %541 = vmatpush1.msra.mxu0 %v368
  %542 = vmatprep.subr.mxu0 0.0
  %543 = vmatpush1.msra.mxu0 %v373
  %544 = vmatprep.subr.mxu0 0.0
  %545 = vmatpush1.msra.mxu0 %v378
  %546 = vmatprep.subr.mxu0 0.0
  %547 = vmatpush1.msra.mxu0 %v383
  %548 = vmatprep.subr.mxu0 0.0
  %549 = vmatpush1.msra.mxu0 %v388
  %550 = vmatprep.subr.mxu0 0.0
  %551 = vmatpush1.msra.mxu0 %v393
  %552 = vmatprep.subr.mxu0 0.0
  %553 = vmatpush1.msra.mxu0 %v398
  %554 = vmatprep.subr.mxu0 0.0
  %555 = vmatpush1.msra.mxu0 %v403
  %556 = vmatprep.subr.mxu0 0.0
  %557 = vmatpush1.msra.mxu0 %v408
  %558 = vmatprep.subr.mxu0 0.0
  %559 = vmatpush1.msra.mxu0 %v413
  %560 = vmatprep.subr.mxu0 0.0
  %561 = vmatpush1.msra.mxu0 %v418
  %562 = vmatprep.subr.mxu0 0.0
  %563 = vmatpush1.msra.mxu0 0.0
  %564 = vmatprep.subr.mxu0 0.0
  %565 = vmatpush1.msra.mxu0 0.0
  %566 = vmatprep.subr.mxu0 0.0
  %567 = vmatpush1.msra.mxu0 0.0
  %568 = vmatprep.subr.mxu0 0.0
  %569 = vmatpush1.msra.mxu0 0.0
  %570 = vmatprep.mubr.f32.mxu0 %v423
  %571 = vmatmul.mubr.f32.gmra.mrb[0].mxu0 %v48
  %v572 = vpop.f32.mrb[0].mxu0
  %v573 = vadd.f32 0.0, %v572
  %v574 = vpop.f32.mrb[0].mxu0
  %575 = vmatprep.mubr.f32.mxu0 %v426
  %576 = vmatmul.mubr.f32.gmra.mrb[0].mxu0 %v50
  %v577 = vpop.f32.mrb[0].mxu0
  %v578 = vadd.f32 0.0, %v577
  %v579 = vpop.f32.mrb[0].mxu0
  %580 = vmatprep.mubr.f32.mxu0 %v429
  %581 = vmatmul.mubr.f32.gmra.mrb[0].mxu0 %v52
  %v582 = vpop.f32.mrb[0].mxu0
  %v583 = vadd.f32 0.0, %v582
  %v584 = vpop.f32.mrb[0].mxu0
  %585 = vmatprep.mubr.f32.mxu0 %v432
  %586 = vmatmul.mubr.f32.gmra.mrb[0].mxu0 %v54
  %v587 = vpop.f32.mrb[0].mxu0
  %v588 = vadd.f32 0.0, %v587
  %v589 = vpop.f32.mrb[0].mxu0
  %590 = vmatprep.mubr.f32.mxu0 %v435
  %591 = vmatmul.mubr.f32.gmra.mrb[0].mxu0 %v56
  %v592 = vpop.f32.mrb[0].mxu0
  %v593 = vadd.f32 0.0, %v592
  %v594 = vpop.f32.mrb[0].mxu0
  %595 = vmatprep.mubr.f32.mxu0 %v438
  %596 = vmatmul.mubr.f32.gmra.mrb[0].mxu0 %v58
  %v597 = vpop.f32.mrb[0].mxu0
  %v598 = vadd.f32 0.0, %v597
  %v599 = vpop.f32.mrb[0].mxu0
  %600 = vmatprep.mubr.f32.mxu0 %v441
  %601 = vmatmul.mubr.f32.gmra.mrb[0].mxu0 %v60
  %v602 = vpop.f32.mrb[0].mxu0
  %v603 = vadd.f32 0.0, %v602
  %v604 = vpop.f32.mrb[0].mxu0
  %605 = vmatprep.mubr.f32.mxu0 %v444
  %606 = vmatmul.mubr.f32.gmra.mrb[0].mxu0 %v62
  %v607 = vpop.f32.mrb[0].mxu0
  %v608 = vadd.f32 0.0, %v607
  %v609 = vpop.f32.mrb[0].mxu0
  %610 = vmatprep.mubr.f32.mxu0 %v447
  %611 = vmatmul.mubr.f32.gmra.mrb[0].mxu0 %v64
  %v612 = vpop.f32.mrb[0].mxu0
  %v613 = vadd.f32 0.0, %v612
  %v614 = vpop.f32.mrb[0].mxu0
  %615 = vmatprep.mubr.f32.mxu0 %v450
  %616 = vmatmul.mubr.f32.gmra.mrb[0].mxu0 %v66
  %v617 = vpop.f32.mrb[0].mxu0
  %v618 = vadd.f32 0.0, %v617
  %v619 = vpop.f32.mrb[0].mxu0
  %620 = vmatprep.mubr.f32.mxu0 %v453
  %621 = vmatmul.mubr.f32.gmra.mrb[0].mxu0 %v68
  %v622 = vpop.f32.mrb[0].mxu0
  %v623 = vadd.f32 0.0, %v622
  %v624 = vpop.f32.mrb[0].mxu0
  %625 = vmatprep.mubr.f32.mxu0 %v456
  %626 = vmatmul.mubr.f32.gmra.mrb[0].mxu0 %v70
  %v627 = vpop.f32.mrb[0].mxu0
  %v628 = vadd.f32 0.0, %v627
  %v629 = vpop.f32.mrb[0].mxu0
  %630 = vmatprep.mubr.f32.mxu0 %v459
  %631 = vmatmul.mubr.f32.gmra.mrb[0].mxu0 %v72
  %v632 = vpop.f32.mrb[0].mxu0
  %v633 = vadd.f32 0.0, %v632
  %v634 = vpop.f32.mrb[0].mxu0
  %635 = vmatprep.mubr.f32.mxu0 %v462
  %636 = vmatmul.mubr.f32.gmra.mrb[0].mxu0 %v74
  %v637 = vpop.f32.mrb[0].mxu0
  %v638 = vadd.f32 0.0, %v637
  %v639 = vpop.f32.mrb[0].mxu0
  %640 = vmatprep.mubr.f32.mxu0 %v465
  %641 = vmatmul.mubr.f32.gmra.mrb[0].mxu0 %v76
  %v642 = vpop.f32.mrb[0].mxu0
  %v643 = vadd.f32 0.0, %v642
  %v644 = vpop.f32.mrb[0].mxu0
  %645 = vmatprep.mubr.f32.mxu0 %v468
  %646 = vmatmul.mubr.f32.gmra.mrb[0].mxu0 %v78
  %v647 = vpop.f32.mrb[0].mxu0
  %v648 = vadd.f32 0.0, %v647
  %v649 = vpop.f32.mrb[0].mxu0
  %650 = vmatprep.mubr.f32.mxu0 %v471
  %651 = vmatmul.mubr.f32.gmra.mrb[0].mxu0 %v80
  %v652 = vpop.f32.mrb[0].mxu0
  %v653 = vadd.f32 0.0, %v652
  %v654 = vpop.f32.mrb[0].mxu0
  %655 = vmatprep.mubr.f32.mxu0 %v474
  %656 = vmatmul.mubr.f32.gmra.mrb[0].mxu0 %v82
  %v657 = vpop.f32.mrb[0].mxu0
  %v658 = vadd.f32 0.0, %v657
  %v659 = vpop.f32.mrb[0].mxu0
  %660 = vmatprep.mubr.f32.mxu0 %v477
  %661 = vmatmul.mubr.f32.gmra.mrb[0].mxu0 %v84
  %v662 = vpop.f32.mrb[0].mxu0
  %v663 = vadd.f32 0.0, %v662
  %v664 = vpop.f32.mrb[0].mxu0
  %665 = vmatprep.mubr.f32.mxu0 %v480
  %666 = vmatmul.mubr.f32.gmra.mrb[0].mxu0 %v86
  %v667 = vpop.f32.mrb[0].mxu0
  %v668 = vadd.f32 0.0, %v667
  %v669 = vpop.f32.mrb[0].mxu0
  %670 = vmatprep.mubr.f32.mxu0 %v483
  %671 = vmatmul.mubr.f32.gmra.mrb[0].mxu0 %v88
  %v672 = vpop.f32.mrb[0].mxu0
  %v673 = vadd.f32 0.0, %v672
  %v674 = vpop.f32.mrb[0].mxu0
  %675 = vmatprep.mubr.f32.mxu0 %v486
  %676 = vmatmul.mubr.f32.gmra.mrb[0].mxu0 %v90
  %v677 = vpop.f32.mrb[0].mxu0
  %v678 = vadd.f32 0.0, %v677
  %v679 = vpop.f32.mrb[0].mxu0
  %680 = vmatprep.mubr.f32.mxu0 %v489
  %681 = vmatmul.mubr.f32.gmra.mrb[0].mxu0 %v92
  %v682 = vpop.f32.mrb[0].mxu0
  %v683 = vadd.f32 0.0, %v682
  %v684 = vpop.f32.mrb[0].mxu0
  %685 = vmatprep.mubr.f32.mxu0 %v492
  %686 = vmatmul.mubr.f32.gmra.mrb[0].mxu0 %v94
  %v687 = vpop.f32.mrb[0].mxu0
  %v688 = vadd.f32 0.0, %v687
  %v689 = vpop.f32.mrb[0].mxu0
  %690 = vmatprep.mubr.f32.mxu0 %v495
  %691 = vmatmul.mubr.f32.gmra.mrb[0].mxu0 %v96
  %v692 = vpop.f32.mrb[0].mxu0
  %v693 = vadd.f32 0.0, %v692
  %v694 = vpop.f32.mrb[0].mxu0
  %695 = vmatprep.mubr.f32.mxu0 %v498
  %696 = vmatmul.mubr.f32.gmra.mrb[0].mxu0 %v98
  %v697 = vpop.f32.mrb[0].mxu0
  %v698 = vadd.f32 0.0, %v697
  %v699 = vpop.f32.mrb[0].mxu0
  %700 = vmatprep.mubr.f32.mxu0 %v501
  %701 = vmatmul.mubr.f32.gmra.mrb[0].mxu0 %v100
  %v702 = vpop.f32.mrb[0].mxu0
  %v703 = vadd.f32 0.0, %v702
  %v704 = vpop.f32.mrb[0].mxu0
  %705 = vmatprep.mubr.f32.mxu0 %v504
  %706 = vmatmul.mubr.f32.gmra.mrb[0].mxu0 %v102
  %v707 = vpop.f32.mrb[0].mxu0
  %v708 = vadd.f32 0.0, %v707
  %v709 = vpop.f32.mrb[0].mxu0
  %710 = vdwg.mxu0
  %v711 = vmax.f32 %v573, 0.0
  %v712 = vmax.f32 %v578, 0.0
  %v713 = vmax.f32 %v583, 0.0
  %v714 = vmax.f32 %v588, 0.0
  %v715 = vmax.f32 %v593, 0.0
  %v716 = vmax.f32 %v598, 0.0
  %v717 = vmax.f32 %v603, 0.0
  %v718 = vmax.f32 %v608, 0.0
  %v719 = vmax.f32 %v613, 0.0
  %v720 = vmax.f32 %v618, 0.0
  %v721 = vmax.f32 %v623, 0.0
  %v722 = vmax.f32 %v628, 0.0
  %v723 = vmax.f32 %v633, 0.0
  %v724 = vmax.f32 %v638, 0.0
  %v725 = vmax.f32 %v643, 0.0
  %v726 = vmax.f32 %v648, 0.0
  %v727 = vmax.f32 %v653, 0.0
  %v728 = vmax.f32 %v658, 0.0
  %v729 = vmax.f32 %v663, 0.0
  %v730 = vmax.f32 %v668, 0.0
  %v731 = vmax.f32 %v673, 0.0
  %v732 = vmax.f32 %v678, 0.0
  %v733 = vmax.f32 %v683, 0.0
  %v734 = vmax.f32 %v688, 0.0
  %v735 = vmax.f32 %v693, 0.0
  %v736 = vmax.f32 %v698, 0.0
  %v737 = vmax.f32 %v703, 0.0
  %v738 = vmax.f32 %v708, 0.0
  %v739 = vlaneseq
  %v740 = vshrl.u32 %v739, 7
  %v741 = vsub.s32 0, %v740
  %v742 = vrot.slane %v110, %v741
  %vm743 = vcmask 261120
  %v745 = vsel %vm743, %v711, 0
  %v748 = vsel %vm743, %v712, 0
  %v751 = vsel %vm743, %v713, 0
  %v754 = vsel %vm743, %v714, 0
  %v757 = vsel %vm743, %v715, 0
  %v760 = vsel %vm743, %v716, 0
  %v763 = vsel %vm743, %v717, 0
  %v766 = vsel %vm743, %v718, 0
  %v769 = vsel %vm743, %v719, 0
  %v772 = vsel %vm743, %v720, 0
  %v775 = vsel %vm743, %v721, 0
  %v778 = vsel %vm743, %v722, 0
  %v781 = vsel %vm743, %v723, 0
  %v784 = vsel %vm743, %v724, 0
  %v787 = vsel %vm743, %v725, 0
  %v790 = vsel %vm743, %v726, 0
  %v793 = vsel %vm743, %v727, 0
  %v796 = vsel %vm743, %v728, 0
  %v799 = vsel %vm743, %v729, 0
  %v802 = vsel %vm743, %v730, 0
  %v805 = vsel %vm743, %v731, 0
  %v808 = vsel %vm743, %v732, 0
  %v811 = vsel %vm743, %v733, 0
  %v814 = vsel %vm743, %v734, 0
  %v817 = vsel %vm743, %v735, 0
  %v820 = vsel %vm743, %v736, 0
  %v823 = vsel %vm743, %v737, 0
  %v826 = vsel %vm743, %v738, 0
  %828 = vmatprep.subr.mxu0 0.0
  %829 = vmatpush1.msra.mxu0 %v104
  %830 = vmatprep.subr.mxu0 0.0
  %831 = vmatpush1.msra.mxu0 %v105
  %832 = vmatprep.subr.mxu0 0.0
  %833 = vmatpush1.msra.mxu0 %v106
  %834 = vmatprep.subr.mxu0 0.0
  %835 = vmatpush1.msra.mxu0 %v107
  %836 = vmatprep.subr.mxu0 0.0
  %837 = vmatpush1.msra.mxu0 0.0
  %838 = vmatprep.subr.mxu0 0.0
  %839 = vmatpush1.msra.mxu0 0.0
  %840 = vmatprep.subr.mxu0 0.0
  %841 = vmatpush1.msra.mxu0 0.0
  %842 = vmatprep.subr.mxu0 0.0
  %843 = vmatpush1.msra.mxu0 0.0
  %844 = vmatprep.subr.mxu0 0.0
  %845 = vmatpush1.msra.mxu0 0.0
  %846 = vmatprep.subr.mxu0 0.0
  %847 = vmatpush1.msra.mxu0 0.0
  %848 = vmatprep.subr.mxu0 0.0
  %849 = vmatpush1.msra.mxu0 0.0
  %850 = vmatprep.subr.mxu0 0.0
  %851 = vmatpush1.msra.mxu0 0.0
  %852 = vmatprep.subr.mxu0 0.0
  %853 = vmatpush1.msra.mxu0 0.0
  %854 = vmatprep.subr.mxu0 0.0
  %855 = vmatpush1.msra.mxu0 0.0
  %856 = vmatprep.subr.mxu0 0.0
  %857 = vmatpush1.msra.mxu0 0.0
  %858 = vmatprep.subr.mxu0 0.0
  %859 = vmatpush1.msra.mxu0 0.0
  %860 = vmatprep.subr.mxu0 0.0
  %861 = vmatpush1.msra.mxu0 0.0
  %862 = vmatprep.subr.mxu0 0.0
  %863 = vmatpush1.msra.mxu0 0.0
  %864 = vmatprep.subr.mxu0 0.0
  %865 = vmatpush1.msra.mxu0 0.0
  %866 = vmatprep.subr.mxu0 0.0
  %867 = vmatpush1.msra.mxu0 0.0
  %868 = vmatprep.subr.mxu0 0.0
  %869 = vmatpush1.msra.mxu0 0.0
  %870 = vmatprep.subr.mxu0 0.0
  %871 = vmatpush1.msra.mxu0 0.0
  %872 = vmatprep.subr.mxu0 0.0
  %873 = vmatpush1.msra.mxu0 0.0
  %874 = vmatprep.subr.mxu0 0.0
  %875 = vmatpush1.msra.mxu0 0.0
  %876 = vmatprep.subr.mxu0 0.0
  %877 = vmatpush1.msra.mxu0 0.0
  %878 = vmatprep.subr.mxu0 0.0
  %879 = vmatpush1.msra.mxu0 0.0
  %880 = vmatprep.subr.mxu0 0.0
  %881 = vmatpush1.msra.mxu0 0.0
  %882 = vmatprep.subr.mxu0 0.0
  %883 = vmatpush1.msra.mxu0 0.0
  %884 = vmatprep.subr.mxu0 0.0
  %885 = vmatpush1.msra.mxu0 0.0
  %886 = vmatprep.subr.mxu0 0.0
  %887 = vmatpush1.msra.mxu0 0.0
  %888 = vmatprep.subr.mxu0 0.0
  %889 = vmatpush1.msra.mxu0 0.0
  %890 = vmatprep.subr.mxu0 0.0
  %891 = vmatpush1.msra.mxu0 0.0
  %892 = vmatprep.mubr.f32.mxu0 0.0
  %893 = vmatmul.mubr.f32.gmra.mrb[0].mxu0 %v745
  %v894 = vpop.f32.mrb[0].mxu0
  %v895 = vadd.f32 %v742, %v894
  %v896 = vpop.f32.mrb[0].mxu0
  %897 = vmatprep.mubr.f32.mxu0 0.0
  %898 = vmatmul.mubr.f32.gmra.mrb[0].mxu0 %v748
  %v899 = vpop.f32.mrb[0].mxu0
  %v900 = vadd.f32 %v742, %v899
  %v901 = vpop.f32.mrb[0].mxu0
  %902 = vmatprep.mubr.f32.mxu0 0.0
  %903 = vmatmul.mubr.f32.gmra.mrb[0].mxu0 %v751
  %v904 = vpop.f32.mrb[0].mxu0
  %v905 = vadd.f32 %v742, %v904
  %v906 = vpop.f32.mrb[0].mxu0
  %907 = vmatprep.mubr.f32.mxu0 0.0
  %908 = vmatmul.mubr.f32.gmra.mrb[0].mxu0 %v754
  %v909 = vpop.f32.mrb[0].mxu0
  %v910 = vadd.f32 %v742, %v909
  %v911 = vpop.f32.mrb[0].mxu0
  %912 = vmatprep.mubr.f32.mxu0 0.0
  %913 = vmatmul.mubr.f32.gmra.mrb[0].mxu0 %v757
  %v914 = vpop.f32.mrb[0].mxu0
  %v915 = vadd.f32 %v742, %v914
  %v916 = vpop.f32.mrb[0].mxu0
  %917 = vmatprep.mubr.f32.mxu0 0.0
  %918 = vmatmul.mubr.f32.gmra.mrb[0].mxu0 %v760
  %v919 = vpop.f32.mrb[0].mxu0
  %v920 = vadd.f32 %v742, %v919
  %v921 = vpop.f32.mrb[0].mxu0
  %922 = vmatprep.mubr.f32.mxu0 0.0
  %923 = vmatmul.mubr.f32.gmra.mrb[0].mxu0 %v763
  %v924 = vpop.f32.mrb[0].mxu0
  %v925 = vadd.f32 %v742, %v924
  %v926 = vpop.f32.mrb[0].mxu0
  %927 = vmatprep.mubr.f32.mxu0 0.0
  %928 = vmatmul.mubr.f32.gmra.mrb[0].mxu0 %v766
  %v929 = vpop.f32.mrb[0].mxu0
  %v930 = vadd.f32 %v742, %v929
  %v931 = vpop.f32.mrb[0].mxu0
  %932 = vmatprep.mubr.f32.mxu0 0.0
  %933 = vmatmul.mubr.f32.gmra.mrb[0].mxu0 %v769
  %v934 = vpop.f32.mrb[0].mxu0
  %v935 = vadd.f32 %v742, %v934
  %v936 = vpop.f32.mrb[0].mxu0
  %937 = vmatprep.mubr.f32.mxu0 0.0
  %938 = vmatmul.mubr.f32.gmra.mrb[0].mxu0 %v772
  %v939 = vpop.f32.mrb[0].mxu0
  %v940 = vadd.f32 %v742, %v939
  %v941 = vpop.f32.mrb[0].mxu0
  %942 = vmatprep.mubr.f32.mxu0 0.0
  %943 = vmatmul.mubr.f32.gmra.mrb[0].mxu0 %v775
  %v944 = vpop.f32.mrb[0].mxu0
  %v945 = vadd.f32 %v742, %v944
  %v946 = vpop.f32.mrb[0].mxu0
  %947 = vmatprep.mubr.f32.mxu0 0.0
  %948 = vmatmul.mubr.f32.gmra.mrb[0].mxu0 %v778
  %v949 = vpop.f32.mrb[0].mxu0
  %v950 = vadd.f32 %v742, %v949
  %v951 = vpop.f32.mrb[0].mxu0
  %952 = vmatprep.mubr.f32.mxu0 0.0
  %953 = vmatmul.mubr.f32.gmra.mrb[0].mxu0 %v781
  %v954 = vpop.f32.mrb[0].mxu0
  %v955 = vadd.f32 %v742, %v954
  %v956 = vpop.f32.mrb[0].mxu0
  %957 = vmatprep.mubr.f32.mxu0 0.0
  %958 = vmatmul.mubr.f32.gmra.mrb[0].mxu0 %v784
  %v959 = vpop.f32.mrb[0].mxu0
  %v960 = vadd.f32 %v742, %v959
  %v961 = vpop.f32.mrb[0].mxu0
  %962 = vmatprep.mubr.f32.mxu0 0.0
  %963 = vmatmul.mubr.f32.gmra.mrb[0].mxu0 %v787
  %v964 = vpop.f32.mrb[0].mxu0
  %v965 = vadd.f32 %v742, %v964
  %v966 = vpop.f32.mrb[0].mxu0
  %967 = vmatprep.mubr.f32.mxu0 0.0
  %968 = vmatmul.mubr.f32.gmra.mrb[0].mxu0 %v790
  %v969 = vpop.f32.mrb[0].mxu0
  %v970 = vadd.f32 %v742, %v969
  %v971 = vpop.f32.mrb[0].mxu0
  %972 = vmatprep.mubr.f32.mxu0 0.0
  %973 = vmatmul.mubr.f32.gmra.mrb[0].mxu0 %v793
  %v974 = vpop.f32.mrb[0].mxu0
  %v975 = vadd.f32 %v742, %v974
  %v976 = vpop.f32.mrb[0].mxu0
  %977 = vmatprep.mubr.f32.mxu0 0.0
  %978 = vmatmul.mubr.f32.gmra.mrb[0].mxu0 %v796
  %v979 = vpop.f32.mrb[0].mxu0
  %v980 = vadd.f32 %v742, %v979
  %v981 = vpop.f32.mrb[0].mxu0
  %982 = vmatprep.mubr.f32.mxu0 0.0
  %983 = vmatmul.mubr.f32.gmra.mrb[0].mxu0 %v799
  %v984 = vpop.f32.mrb[0].mxu0
  %v985 = vadd.f32 %v742, %v984
  %v986 = vpop.f32.mrb[0].mxu0
  %987 = vmatprep.mubr.f32.mxu0 0.0
  %988 = vmatmul.mubr.f32.gmra.mrb[0].mxu0 %v802
  %v989 = vpop.f32.mrb[0].mxu0
  %v990 = vadd.f32 %v742, %v989
  %v991 = vpop.f32.mrb[0].mxu0
  %992 = vmatprep.mubr.f32.mxu0 0.0
  %993 = vmatmul.mubr.f32.gmra.mrb[0].mxu0 %v805
  %v994 = vpop.f32.mrb[0].mxu0
  %v995 = vadd.f32 %v742, %v994
  %v996 = vpop.f32.mrb[0].mxu0
  %997 = vmatprep.mubr.f32.mxu0 0.0
  %998 = vmatmul.mubr.f32.gmra.mrb[0].mxu0 %v808
  %v999 = vpop.f32.mrb[0].mxu0
  %v1000 = vadd.f32 %v742, %v999
  %v1001 = vpop.f32.mrb[0].mxu0
  %1002 = vmatprep.mubr.f32.mxu0 0.0
  %1003 = vmatmul.mubr.f32.gmra.mrb[0].mxu0 %v811
  %v1004 = vpop.f32.mrb[0].mxu0
  %v1005 = vadd.f32 %v742, %v1004
  %v1006 = vpop.f32.mrb[0].mxu0
  %1007 = vmatprep.mubr.f32.mxu0 0.0
  %1008 = vmatmul.mubr.f32.gmra.mrb[0].mxu0 %v814
  %v1009 = vpop.f32.mrb[0].mxu0
  %v1010 = vadd.f32 %v742, %v1009
  %v1011 = vpop.f32.mrb[0].mxu0
  %1012 = vmatprep.mubr.f32.mxu0 0.0
  %1013 = vmatmul.mubr.f32.gmra.mrb[0].mxu0 %v817
  %v1014 = vpop.f32.mrb[0].mxu0
  %v1015 = vadd.f32 %v742, %v1014
  %v1016 = vpop.f32.mrb[0].mxu0
  %1017 = vmatprep.mubr.f32.mxu0 0.0
  %1018 = vmatmul.mubr.f32.gmra.mrb[0].mxu0 %v820
  %v1019 = vpop.f32.mrb[0].mxu0
  %v1020 = vadd.f32 %v742, %v1019
  %v1021 = vpop.f32.mrb[0].mxu0
  %1022 = vmatprep.mubr.f32.mxu0 0.0
  %1023 = vmatmul.mubr.f32.gmra.mrb[0].mxu0 %v823
  %v1024 = vpop.f32.mrb[0].mxu0
  %v1025 = vadd.f32 %v742, %v1024
  %v1026 = vpop.f32.mrb[0].mxu0
  %1027 = vmatprep.mubr.f32.mxu0 0.0
  %1028 = vmatmul.mubr.f32.gmra.mrb[0].mxu0 %v826
  %v1029 = vpop.f32.mrb[0].mxu0
  %v1030 = vadd.f32 %v742, %v1029
  %v1031 = vpop.f32.mrb[0].mxu0
  %1032 = vdwg.mxu0
  %1033 = vmatprep.subr.mxu0 0.0
  %1034 = vmatpush1.msra.mxu0 %v895
  %1035 = vmatprep.subr.mxu0 0.0
  %1036 = vmatpush1.msra.mxu0 %v900
  %1037 = vmatprep.subr.mxu0 0.0
  %1038 = vmatpush1.msra.mxu0 %v905
  %1039 = vmatprep.subr.mxu0 0.0
  %1040 = vmatpush1.msra.mxu0 %v910
  %1041 = vmatprep.subr.mxu0 0.0
  %1042 = vmatpush1.msra.mxu0 %v915
  %1043 = vmatprep.subr.mxu0 0.0
  %1044 = vmatpush1.msra.mxu0 %v920
  %1045 = vmatprep.subr.mxu0 0.0
  %1046 = vmatpush1.msra.mxu0 %v925
  %1047 = vmatprep.subr.mxu0 0.0
  %1048 = vmatpush1.msra.mxu0 %v930
  %1049 = vmatprep.subr.mxu0 0.0
  %1050 = vmatpush1.msra.mxu0 %v935
  %1051 = vmatprep.subr.mxu0 0.0
  %1052 = vmatpush1.msra.mxu0 %v940
  %1053 = vmatprep.subr.mxu0 0.0
  %1054 = vmatpush1.msra.mxu0 %v945
  %1055 = vmatprep.subr.mxu0 0.0
  %1056 = vmatpush1.msra.mxu0 %v950
  %1057 = vmatprep.subr.mxu0 0.0
  %1058 = vmatpush1.msra.mxu0 %v955
  %1059 = vmatprep.subr.mxu0 0.0
  %1060 = vmatpush1.msra.mxu0 %v960
  %1061 = vmatprep.subr.mxu0 0.0
  %1062 = vmatpush1.msra.mxu0 %v965
  %1063 = vmatprep.subr.mxu0 0.0
  %1064 = vmatpush1.msra.mxu0 %v970
  %1065 = vmatprep.subr.mxu0 0.0
  %1066 = vmatpush1.msra.mxu0 %v975
  %1067 = vmatprep.subr.mxu0 0.0
  %1068 = vmatpush1.msra.mxu0 %v980
  %1069 = vmatprep.subr.mxu0 0.0
  %1070 = vmatpush1.msra.mxu0 %v985
  %1071 = vmatprep.subr.mxu0 0.0
  %1072 = vmatpush1.msra.mxu0 %v990
  %1073 = vmatprep.subr.mxu0 0.0
  %1074 = vmatpush1.msra.mxu0 %v995
  %1075 = vmatprep.subr.mxu0 0.0
  %1076 = vmatpush1.msra.mxu0 %v1000
  %1077 = vmatprep.subr.mxu0 0.0
  %1078 = vmatpush1.msra.mxu0 %v1005
  %1079 = vmatprep.subr.mxu0 0.0
  %1080 = vmatpush1.msra.mxu0 %v1010
  %1081 = vmatprep.subr.mxu0 0.0
  %1082 = vmatpush1.msra.mxu0 %v1015
  %1083 = vmatprep.subr.mxu0 0.0
  %1084 = vmatpush1.msra.mxu0 %v1020
  %1085 = vmatprep.subr.mxu0 0.0
  %1086 = vmatpush1.msra.mxu0 %v1025
  %1087 = vmatprep.subr.mxu0 0.0
  %1088 = vmatpush1.msra.mxu0 %v1030
  %1089 = vmatprep.subr.mxu0 0.0
  %1090 = vmatpush1.msra.mxu0 0.0
  %1091 = vmatprep.subr.mxu0 0.0
  %1092 = vmatpush1.msra.mxu0 0.0
  %1093 = vmatprep.subr.mxu0 0.0
  %1094 = vmatpush1.msra.mxu0 0.0
  %1095 = vmatprep.subr.mxu0 0.0
  %1096 = vmatpush1.msra.mxu0 0.0
  %1097 = vmatprep.mubr.f32.mxu0 %v423
  %1098 = vmatmul.mubr.f32.gmra.mrb[0].mxu0 %v48
  %v1099 = vpop.f32.mrb[0].mxu0
  %v1100 = vadd.f32 0.0, %v1099
  %v1101 = vpop.f32.mrb[0].mxu0
  %1102 = vmatprep.mubr.f32.mxu0 %v426
  %1103 = vmatmul.mubr.f32.gmra.mrb[0].mxu0 %v50
  %v1104 = vpop.f32.mrb[0].mxu0
  %v1105 = vadd.f32 0.0, %v1104
  %v1106 = vpop.f32.mrb[0].mxu0
  %1107 = vmatprep.mubr.f32.mxu0 %v429
  %1108 = vmatmul.mubr.f32.gmra.mrb[0].mxu0 %v52
  %v1109 = vpop.f32.mrb[0].mxu0
  %v1110 = vadd.f32 0.0, %v1109
  %v1111 = vpop.f32.mrb[0].mxu0
  %1112 = vmatprep.mubr.f32.mxu0 %v432
  %1113 = vmatmul.mubr.f32.gmra.mrb[0].mxu0 %v54
  %v1114 = vpop.f32.mrb[0].mxu0
  %v1115 = vadd.f32 0.0, %v1114
  %v1116 = vpop.f32.mrb[0].mxu0
  %1117 = vmatprep.mubr.f32.mxu0 %v435
  %1118 = vmatmul.mubr.f32.gmra.mrb[0].mxu0 %v56
  %v1119 = vpop.f32.mrb[0].mxu0
  %v1120 = vadd.f32 0.0, %v1119
  %v1121 = vpop.f32.mrb[0].mxu0
  %1122 = vmatprep.mubr.f32.mxu0 %v438
  %1123 = vmatmul.mubr.f32.gmra.mrb[0].mxu0 %v58
  %v1124 = vpop.f32.mrb[0].mxu0
  %v1125 = vadd.f32 0.0, %v1124
  %v1126 = vpop.f32.mrb[0].mxu0
  %1127 = vmatprep.mubr.f32.mxu0 %v441
  %1128 = vmatmul.mubr.f32.gmra.mrb[0].mxu0 %v60
  %v1129 = vpop.f32.mrb[0].mxu0
  %v1130 = vadd.f32 0.0, %v1129
  %v1131 = vpop.f32.mrb[0].mxu0
  %1132 = vmatprep.mubr.f32.mxu0 %v444
  %1133 = vmatmul.mubr.f32.gmra.mrb[0].mxu0 %v62
  %v1134 = vpop.f32.mrb[0].mxu0
  %v1135 = vadd.f32 0.0, %v1134
  %v1136 = vpop.f32.mrb[0].mxu0
  %1137 = vmatprep.mubr.f32.mxu0 %v447
  %1138 = vmatmul.mubr.f32.gmra.mrb[0].mxu0 %v64
  %v1139 = vpop.f32.mrb[0].mxu0
  %v1140 = vadd.f32 0.0, %v1139
  %v1141 = vpop.f32.mrb[0].mxu0
  %1142 = vmatprep.mubr.f32.mxu0 %v450
  %1143 = vmatmul.mubr.f32.gmra.mrb[0].mxu0 %v66
  %v1144 = vpop.f32.mrb[0].mxu0
  %v1145 = vadd.f32 0.0, %v1144
  %v1146 = vpop.f32.mrb[0].mxu0
  %1147 = vmatprep.mubr.f32.mxu0 %v453
  %1148 = vmatmul.mubr.f32.gmra.mrb[0].mxu0 %v68
  %v1149 = vpop.f32.mrb[0].mxu0
  %v1150 = vadd.f32 0.0, %v1149
  %v1151 = vpop.f32.mrb[0].mxu0
  %1152 = vmatprep.mubr.f32.mxu0 %v456
  %1153 = vmatmul.mubr.f32.gmra.mrb[0].mxu0 %v70
  %v1154 = vpop.f32.mrb[0].mxu0
  %v1155 = vadd.f32 0.0, %v1154
  %v1156 = vpop.f32.mrb[0].mxu0
  %1157 = vmatprep.mubr.f32.mxu0 %v459
  %1158 = vmatmul.mubr.f32.gmra.mrb[0].mxu0 %v72
  %v1159 = vpop.f32.mrb[0].mxu0
  %v1160 = vadd.f32 0.0, %v1159
  %v1161 = vpop.f32.mrb[0].mxu0
  %1162 = vmatprep.mubr.f32.mxu0 %v462
  %1163 = vmatmul.mubr.f32.gmra.mrb[0].mxu0 %v74
  %v1164 = vpop.f32.mrb[0].mxu0
  %v1165 = vadd.f32 0.0, %v1164
  %v1166 = vpop.f32.mrb[0].mxu0
  %1167 = vmatprep.mubr.f32.mxu0 %v465
  %1168 = vmatmul.mubr.f32.gmra.mrb[0].mxu0 %v76
  %v1169 = vpop.f32.mrb[0].mxu0
  %v1170 = vadd.f32 0.0, %v1169
  %v1171 = vpop.f32.mrb[0].mxu0
  %1172 = vmatprep.mubr.f32.mxu0 %v468
  %1173 = vmatmul.mubr.f32.gmra.mrb[0].mxu0 %v78
  %v1174 = vpop.f32.mrb[0].mxu0
  %v1175 = vadd.f32 0.0, %v1174
  %v1176 = vpop.f32.mrb[0].mxu0
  %1177 = vmatprep.mubr.f32.mxu0 %v471
  %1178 = vmatmul.mubr.f32.gmra.mrb[0].mxu0 %v80
  %v1179 = vpop.f32.mrb[0].mxu0
  %v1180 = vadd.f32 0.0, %v1179
  %v1181 = vpop.f32.mrb[0].mxu0
  %1182 = vmatprep.mubr.f32.mxu0 %v474
  %1183 = vmatmul.mubr.f32.gmra.mrb[0].mxu0 %v82
  %v1184 = vpop.f32.mrb[0].mxu0
  %v1185 = vadd.f32 0.0, %v1184
  %v1186 = vpop.f32.mrb[0].mxu0
  %1187 = vmatprep.mubr.f32.mxu0 %v477
  %1188 = vmatmul.mubr.f32.gmra.mrb[0].mxu0 %v84
  %v1189 = vpop.f32.mrb[0].mxu0
  %v1190 = vadd.f32 0.0, %v1189
  %v1191 = vpop.f32.mrb[0].mxu0
  %1192 = vmatprep.mubr.f32.mxu0 %v480
  %1193 = vmatmul.mubr.f32.gmra.mrb[0].mxu0 %v86
  %v1194 = vpop.f32.mrb[0].mxu0
  %v1195 = vadd.f32 0.0, %v1194
  %v1196 = vpop.f32.mrb[0].mxu0
  %1197 = vmatprep.mubr.f32.mxu0 %v483
  %1198 = vmatmul.mubr.f32.gmra.mrb[0].mxu0 %v88
  %v1199 = vpop.f32.mrb[0].mxu0
  %v1200 = vadd.f32 0.0, %v1199
  %v1201 = vpop.f32.mrb[0].mxu0
  %1202 = vmatprep.mubr.f32.mxu0 %v486
  %1203 = vmatmul.mubr.f32.gmra.mrb[0].mxu0 %v90
  %v1204 = vpop.f32.mrb[0].mxu0
  %v1205 = vadd.f32 0.0, %v1204
  %v1206 = vpop.f32.mrb[0].mxu0
  %1207 = vmatprep.mubr.f32.mxu0 %v489
  %1208 = vmatmul.mubr.f32.gmra.mrb[0].mxu0 %v92
  %v1209 = vpop.f32.mrb[0].mxu0
  %v1210 = vadd.f32 0.0, %v1209
  %v1211 = vpop.f32.mrb[0].mxu0
  %1212 = vmatprep.mubr.f32.mxu0 %v492
  %1213 = vmatmul.mubr.f32.gmra.mrb[0].mxu0 %v94
  %v1214 = vpop.f32.mrb[0].mxu0
  %v1215 = vadd.f32 0.0, %v1214
  %v1216 = vpop.f32.mrb[0].mxu0
  %1217 = vmatprep.mubr.f32.mxu0 %v495
  %1218 = vmatmul.mubr.f32.gmra.mrb[0].mxu0 %v96
  %v1219 = vpop.f32.mrb[0].mxu0
  %v1220 = vadd.f32 0.0, %v1219
  %v1221 = vpop.f32.mrb[0].mxu0
  %1222 = vmatprep.mubr.f32.mxu0 %v498
  %1223 = vmatmul.mubr.f32.gmra.mrb[0].mxu0 %v98
  %v1224 = vpop.f32.mrb[0].mxu0
  %v1225 = vadd.f32 0.0, %v1224
  %v1226 = vpop.f32.mrb[0].mxu0
  %1227 = vmatprep.mubr.f32.mxu0 %v501
  %1228 = vmatmul.mubr.f32.gmra.mrb[0].mxu0 %v100
  %v1229 = vpop.f32.mrb[0].mxu0
  %v1230 = vadd.f32 0.0, %v1229
  %v1231 = vpop.f32.mrb[0].mxu0
  %1232 = vmatprep.mubr.f32.mxu0 %v504
  %1233 = vmatmul.mubr.f32.gmra.mrb[0].mxu0 %v102
  %v1234 = vpop.f32.mrb[0].mxu0
  %v1235 = vadd.f32 0.0, %v1234
  %v1236 = vpop.f32.mrb[0].mxu0
  %1237 = vdwg.mxu0
  %v1238 = vmax.f32 %v1100, 0.0
  %v1239 = vmax.f32 %v1105, 0.0
  %v1240 = vmax.f32 %v1110, 0.0
  %v1241 = vmax.f32 %v1115, 0.0
  %v1242 = vmax.f32 %v1120, 0.0
  %v1243 = vmax.f32 %v1125, 0.0
  %v1244 = vmax.f32 %v1130, 0.0
  %v1245 = vmax.f32 %v1135, 0.0
  %v1246 = vmax.f32 %v1140, 0.0
  %v1247 = vmax.f32 %v1145, 0.0
  %v1248 = vmax.f32 %v1150, 0.0
  %v1249 = vmax.f32 %v1155, 0.0
  %v1250 = vmax.f32 %v1160, 0.0
  %v1251 = vmax.f32 %v1165, 0.0
  %v1252 = vmax.f32 %v1170, 0.0
  %v1253 = vmax.f32 %v1175, 0.0
  %v1254 = vmax.f32 %v1180, 0.0
  %v1255 = vmax.f32 %v1185, 0.0
  %v1256 = vmax.f32 %v1190, 0.0
  %v1257 = vmax.f32 %v1195, 0.0
  %v1258 = vmax.f32 %v1200, 0.0
  %v1259 = vmax.f32 %v1205, 0.0
  %v1260 = vmax.f32 %v1210, 0.0
  %v1261 = vmax.f32 %v1215, 0.0
  %v1262 = vmax.f32 %v1220, 0.0
  %v1263 = vmax.f32 %v1225, 0.0
  %v1264 = vmax.f32 %v1230, 0.0
  %v1265 = vmax.f32 %v1235, 0.0
  %v1266 = vlaneseq
  %v1267 = vshrl.u32 %v1266, 7
  %v1268 = vadd.s32 %v1267, 8
  %v1269 = vlaneseq
  %v1270 = vand.u32 %v1269, 127
  %v1271 = vadd.s32 %v1270, 128
  %v1272 = vmul.u32 %v1267, 14
  %v1273 = vmul.u32 %v1268, 14
  %vm1274 = vcmp.ge.s32.totalorder %v1270, %v1272
  %vm1275 = vcmp.ge.s32.totalorder %v1271, %v1272
  %vm1276 = vcmp.ge.s32.totalorder %v1270, %v1273
  %vm1277 = vcmp.ge.s32.totalorder %v1271, %v1273
  %v1278 = vadd.s32 %v1272, 14
  %v1279 = vadd.s32 %v1273, 14
  %vm1280 = vcmp.lt.s32.totalorder %v1270, %v1278
  %vm1281 = vcmp.lt.s32.totalorder %v1271, %v1278
  %vm1282 = vcmp.lt.s32.totalorder %v1270, %v1279
  %vm1283 = vcmp.lt.s32.totalorder %v1271, %v1279
  %vm1284 = vmand %vm1274, %vm1280
  %vm1285 = vmand %vm1275, %vm1281
  %vm1286 = vmand %vm1276, %vm1282
  %vm1287 = vmand %vm1277, %vm1283
  %v1288 = vsel %vm1284, 0.071428575, 0.0
  %v1289 = vsel %vm1285, 0.071428575, 0.0
  %v1290 = vsel %vm1286, 0.071428575, 0.0
  %v1291 = vsel %vm1287, 0.071428575, 0.0
  %v1293 = vsel %vm421, %v1289, 0
  %v1296 = vsel %vm421, %v1291, 0
  %1298 = vmatprep.subr.mxu0 0.0
  %1299 = vmatpush1.msra.mxu0 %v1238
  %1300 = vmatprep.subr.mxu0 0.0
  %1301 = vmatpush1.msra.mxu0 %v1239
  %1302 = vmatprep.subr.mxu0 0.0
  %1303 = vmatpush1.msra.mxu0 %v1240
  %1304 = vmatprep.subr.mxu0 0.0
  %1305 = vmatpush1.msra.mxu0 %v1241
  %1306 = vmatprep.subr.mxu0 0.0
  %1307 = vmatpush1.msra.mxu0 %v1242
  %1308 = vmatprep.subr.mxu0 0.0
  %1309 = vmatpush1.msra.mxu0 %v1243
  %1310 = vmatprep.subr.mxu0 0.0
  %1311 = vmatpush1.msra.mxu0 %v1244
  %1312 = vmatprep.subr.mxu0 0.0
  %1313 = vmatpush1.msra.mxu0 %v1245
  %1314 = vmatprep.subr.mxu0 0.0
  %1315 = vmatpush1.msra.mxu0 %v1246
  %1316 = vmatprep.subr.mxu0 0.0
  %1317 = vmatpush1.msra.mxu0 %v1247
  %1318 = vmatprep.subr.mxu0 0.0
  %1319 = vmatpush1.msra.mxu0 %v1248
  %1320 = vmatprep.subr.mxu0 0.0
  %1321 = vmatpush1.msra.mxu0 %v1249
  %1322 = vmatprep.subr.mxu0 0.0
  %1323 = vmatpush1.msra.mxu0 %v1250
  %1324 = vmatprep.subr.mxu0 0.0
  %1325 = vmatpush1.msra.mxu0 %v1251
  %1326 = vmatprep.subr.mxu0 0.0
  %1327 = vmatpush1.msra.mxu0 %v1252
  %1328 = vmatprep.subr.mxu0 0.0
  %1329 = vmatpush1.msra.mxu0 %v1253
  %1330 = vmatprep.subr.mxu0 0.0
  %1331 = vmatpush1.msra.mxu0 %v1254
  %1332 = vmatprep.subr.mxu0 0.0
  %1333 = vmatpush1.msra.mxu0 %v1255
  %1334 = vmatprep.subr.mxu0 0.0
  %1335 = vmatpush1.msra.mxu0 %v1256
  %1336 = vmatprep.subr.mxu0 0.0
  %1337 = vmatpush1.msra.mxu0 %v1257
  %1338 = vmatprep.subr.mxu0 0.0
  %1339 = vmatpush1.msra.mxu0 %v1258
  %1340 = vmatprep.subr.mxu0 0.0
  %1341 = vmatpush1.msra.mxu0 %v1259
  %1342 = vmatprep.subr.mxu0 0.0
  %1343 = vmatpush1.msra.mxu0 %v1260
  %1344 = vmatprep.subr.mxu0 0.0
  %1345 = vmatpush1.msra.mxu0 %v1261
  %1346 = vmatprep.subr.mxu0 0.0
  %1347 = vmatpush1.msra.mxu0 %v1262
  %1348 = vmatprep.subr.mxu0 0.0
  %1349 = vmatpush1.msra.mxu0 %v1263
  %1350 = vmatprep.subr.mxu0 0.0
  %1351 = vmatpush1.msra.mxu0 %v1264
  %1352 = vmatprep.subr.mxu0 0.0
  %1353 = vmatpush1.msra.mxu0 %v1265
  %1354 = vmatprep.subr.mxu0 0.0
  %1355 = vmatpush1.msra.mxu0 0.0
  %1356 = vmatprep.subr.mxu0 0.0
  %1357 = vmatpush1.msra.mxu0 0.0
  %1358 = vmatprep.subr.mxu0 0.0
  %1359 = vmatpush1.msra.mxu0 0.0
  %1360 = vmatprep.subr.mxu0 0.0
  %1361 = vmatpush1.msra.mxu0 0.0
  %1362 = vmatprep.mubr.f32.mxu0 %v1293
  %1363 = vmatmul.mubr.f32.gmra.mrb[0].mxu0 %v1288
  %v1364 = vpop.f32.mrb[0].mxu0
  %v1365 = vadd.f32 0.0, %v1364
  %v1366 = vpop.f32.mrb[0].mxu0
  %1367 = vmatprep.mubr.f32.mxu0 %v1296
  %1368 = vmatmul.mubr.f32.gmra.mrb[0].mxu0 %v1290
  %v1369 = vpop.f32.mrb[0].mxu0
  %v1370 = vadd.f32 0.0, %v1369
  %v1371 = vpop.f32.mrb[0].mxu0
  %1372 = vdwg.mxu0
  %v1373 = vadd.s32 %v1267, 16
  %v1374 = vadd.s32 %v1267, 24
  %v1375 = vadd.s32 %v1270, 256
  %v1376 = vadd.s32 %v1270, 384
  %v1377 = vadd.s32 %v1270, 512
  %v1378 = vadd.s32 %v1270, 640
  %v1379 = vadd.s32 %v1270, 768
  %v1380 = vadd.s32 %v1270, 896
  %v1381 = vmul.u32 %v1267, 32
  %v1382 = vmul.u32 %v1268, 32
  %v1383 = vmul.u32 %v1373, 32
  %v1384 = vmul.u32 %v1374, 32
  %vm1385 = vcmp.ge.s32.totalorder %v1270, %v1381
  %vm1386 = vcmp.ge.s32.totalorder %v1271, %v1381
  %vm1387 = vcmp.ge.s32.totalorder %v1375, %v1381
  %vm1388 = vcmp.ge.s32.totalorder %v1376, %v1381
  %vm1389 = vcmp.ge.s32.totalorder %v1377, %v1381
  %vm1390 = vcmp.ge.s32.totalorder %v1378, %v1381
  %vm1391 = vcmp.ge.s32.totalorder %v1379, %v1381
  %vm1392 = vcmp.ge.s32.totalorder %v1380, %v1381
  %vm1393 = vcmp.ge.s32.totalorder %v1270, %v1382
  %vm1394 = vcmp.ge.s32.totalorder %v1271, %v1382
  %vm1395 = vcmp.ge.s32.totalorder %v1375, %v1382
  %vm1396 = vcmp.ge.s32.totalorder %v1376, %v1382
  %vm1397 = vcmp.ge.s32.totalorder %v1377, %v1382
  %vm1398 = vcmp.ge.s32.totalorder %v1378, %v1382
  %vm1399 = vcmp.ge.s32.totalorder %v1379, %v1382
  %vm1400 = vcmp.ge.s32.totalorder %v1380, %v1382
  %vm1401 = vcmp.ge.s32.totalorder %v1270, %v1383
  %vm1402 = vcmp.ge.s32.totalorder %v1271, %v1383
  %vm1403 = vcmp.ge.s32.totalorder %v1375, %v1383
  %vm1404 = vcmp.ge.s32.totalorder %v1376, %v1383
  %vm1405 = vcmp.ge.s32.totalorder %v1377, %v1383
  %vm1406 = vcmp.ge.s32.totalorder %v1378, %v1383
  %vm1407 = vcmp.ge.s32.totalorder %v1379, %v1383
  %vm1408 = vcmp.ge.s32.totalorder %v1380, %v1383
  %vm1409 = vcmp.ge.s32.totalorder %v1270, %v1384
  %vm1410 = vcmp.ge.s32.totalorder %v1271, %v1384
  %vm1411 = vcmp.ge.s32.totalorder %v1375, %v1384
  %vm1412 = vcmp.ge.s32.totalorder %v1376, %v1384
  %vm1413 = vcmp.ge.s32.totalorder %v1377, %v1384
  %vm1414 = vcmp.ge.s32.totalorder %v1378, %v1384
  %vm1415 = vcmp.ge.s32.totalorder %v1379, %v1384
  %vm1416 = vcmp.ge.s32.totalorder %v1380, %v1384
  %v1417 = vadd.s32 %v1381, 32
  %v1418 = vadd.s32 %v1382, 32
  %v1419 = vadd.s32 %v1383, 32
  %v1420 = vadd.s32 %v1384, 32
  %vm1421 = vcmp.lt.s32.totalorder %v1270, %v1417
  %vm1422 = vcmp.lt.s32.totalorder %v1271, %v1417
  %vm1423 = vcmp.lt.s32.totalorder %v1375, %v1417
  %vm1424 = vcmp.lt.s32.totalorder %v1376, %v1417
  %vm1425 = vcmp.lt.s32.totalorder %v1377, %v1417
  %vm1426 = vcmp.lt.s32.totalorder %v1378, %v1417
  %vm1427 = vcmp.lt.s32.totalorder %v1379, %v1417
  %vm1428 = vcmp.lt.s32.totalorder %v1380, %v1417
  %vm1429 = vcmp.lt.s32.totalorder %v1270, %v1418
  %vm1430 = vcmp.lt.s32.totalorder %v1271, %v1418
  %vm1431 = vcmp.lt.s32.totalorder %v1375, %v1418
  %vm1432 = vcmp.lt.s32.totalorder %v1376, %v1418
  %vm1433 = vcmp.lt.s32.totalorder %v1377, %v1418
  %vm1434 = vcmp.lt.s32.totalorder %v1378, %v1418
  %vm1435 = vcmp.lt.s32.totalorder %v1379, %v1418
  %vm1436 = vcmp.lt.s32.totalorder %v1380, %v1418
  %vm1437 = vcmp.lt.s32.totalorder %v1270, %v1419
  %vm1438 = vcmp.lt.s32.totalorder %v1271, %v1419
  %vm1439 = vcmp.lt.s32.totalorder %v1375, %v1419
  %vm1440 = vcmp.lt.s32.totalorder %v1376, %v1419
  %vm1441 = vcmp.lt.s32.totalorder %v1377, %v1419
  %vm1442 = vcmp.lt.s32.totalorder %v1378, %v1419
  %vm1443 = vcmp.lt.s32.totalorder %v1379, %v1419
  %vm1444 = vcmp.lt.s32.totalorder %v1380, %v1419
  %vm1445 = vcmp.lt.s32.totalorder %v1270, %v1420
  %vm1446 = vcmp.lt.s32.totalorder %v1271, %v1420
  %vm1447 = vcmp.lt.s32.totalorder %v1375, %v1420
  %vm1448 = vcmp.lt.s32.totalorder %v1376, %v1420
  %vm1449 = vcmp.lt.s32.totalorder %v1377, %v1420
  %vm1450 = vcmp.lt.s32.totalorder %v1378, %v1420
  %vm1451 = vcmp.lt.s32.totalorder %v1379, %v1420
  %vm1452 = vcmp.lt.s32.totalorder %v1380, %v1420
  %vm1453 = vmand %vm1385, %vm1421
  %vm1454 = vmand %vm1386, %vm1422
  %vm1455 = vmand %vm1387, %vm1423
  %vm1456 = vmand %vm1388, %vm1424
  %vm1457 = vmand %vm1389, %vm1425
  %vm1458 = vmand %vm1390, %vm1426
  %vm1459 = vmand %vm1391, %vm1427
  %vm1460 = vmand %vm1392, %vm1428
  %vm1461 = vmand %vm1393, %vm1429
  %vm1462 = vmand %vm1394, %vm1430
  %vm1463 = vmand %vm1395, %vm1431
  %vm1464 = vmand %vm1396, %vm1432
  %vm1465 = vmand %vm1397, %vm1433
  %vm1466 = vmand %vm1398, %vm1434
  %vm1467 = vmand %vm1399, %vm1435
  %vm1468 = vmand %vm1400, %vm1436
  %vm1469 = vmand %vm1401, %vm1437
  %vm1470 = vmand %vm1402, %vm1438
  %vm1471 = vmand %vm1403, %vm1439
  %vm1472 = vmand %vm1404, %vm1440
  %vm1473 = vmand %vm1405, %vm1441
  %vm1474 = vmand %vm1406, %vm1442
  %vm1475 = vmand %vm1407, %vm1443
  %vm1476 = vmand %vm1408, %vm1444
  %vm1477 = vmand %vm1409, %vm1445
  %vm1478 = vmand %vm1410, %vm1446
  %vm1479 = vmand %vm1411, %vm1447
  %vm1480 = vmand %vm1412, %vm1448
  %vm1481 = vmand %vm1413, %vm1449
  %vm1482 = vmand %vm1414, %vm1450
  %vm1483 = vmand %vm1415, %vm1451
  %vm1484 = vmand %vm1416, %vm1452
  %v1485 = vsel %vm1453, 1.0, 0.0
  %v1486 = vsel %vm1454, 1.0, 0.0
  %v1487 = vsel %vm1455, 1.0, 0.0
  %v1488 = vsel %vm1456, 1.0, 0.0
  %v1489 = vsel %vm1457, 1.0, 0.0
  %v1490 = vsel %vm1458, 1.0, 0.0
  %v1491 = vsel %vm1459, 1.0, 0.0
  %v1492 = vsel %vm1460, 1.0, 0.0
  %v1493 = vsel %vm1461, 1.0, 0.0
  %v1494 = vsel %vm1462, 1.0, 0.0
  %v1495 = vsel %vm1463, 1.0, 0.0
  %v1496 = vsel %vm1464, 1.0, 0.0
  %v1497 = vsel %vm1465, 1.0, 0.0
  %v1498 = vsel %vm1466, 1.0, 0.0
  %v1499 = vsel %vm1467, 1.0, 0.0
  %v1500 = vsel %vm1468, 1.0, 0.0
  %v1501 = vsel %vm1469, 1.0, 0.0
  %v1502 = vsel %vm1470, 1.0, 0.0
  %v1503 = vsel %vm1471, 1.0, 0.0
  %v1504 = vsel %vm1472, 1.0, 0.0
  %v1505 = vsel %vm1473, 1.0, 0.0
  %v1506 = vsel %vm1474, 1.0, 0.0
  %v1507 = vsel %vm1475, 1.0, 0.0
  %v1508 = vsel %vm1476, 1.0, 0.0
  %v1509 = vsel %vm1477, 1.0, 0.0
  %v1510 = vsel %vm1478, 1.0, 0.0
  %v1511 = vsel %vm1479, 1.0, 0.0
  %v1512 = vsel %vm1480, 1.0, 0.0
  %v1513 = vsel %vm1481, 1.0, 0.0
  %v1514 = vsel %vm1482, 1.0, 0.0
  %v1515 = vsel %vm1483, 1.0, 0.0
  %v1516 = vsel %vm1484, 1.0, 0.0
  %v1518 = vsel %vm743, %v1365, 0
  %v1521 = vsel %vm743, %v1370, 0
  %1523 = vmatprep.subr.mxu0 %v1486
  %1524 = vmatpush1.msra.mxu0 %v1485
  %1525 = vmatprep.subr.mxu0 %v1494
  %1526 = vmatpush1.msra.mxu0 %v1493
  %1527 = vmatprep.subr.mxu0 %v1502
  %1528 = vmatpush1.msra.mxu0 %v1501
  %1529 = vmatprep.subr.mxu0 %v1510
  %1530 = vmatpush1.msra.mxu0 %v1509
  %1531 = vmatprep.subr.mxu0 0.0
  %1532 = vmatpush1.msra.mxu0 0.0
  %1533 = vmatprep.subr.mxu0 0.0
  %1534 = vmatpush1.msra.mxu0 0.0
  %1535 = vmatprep.subr.mxu0 0.0
  %1536 = vmatpush1.msra.mxu0 0.0
  %1537 = vmatprep.subr.mxu0 0.0
  %1538 = vmatpush1.msra.mxu0 0.0
  %1539 = vmatprep.subr.mxu0 0.0
  %1540 = vmatpush1.msra.mxu0 0.0
  %1541 = vmatprep.subr.mxu0 0.0
  %1542 = vmatpush1.msra.mxu0 0.0
  %1543 = vmatprep.subr.mxu0 0.0
  %1544 = vmatpush1.msra.mxu0 0.0
  %1545 = vmatprep.subr.mxu0 0.0
  %1546 = vmatpush1.msra.mxu0 0.0
  %1547 = vmatprep.subr.mxu0 0.0
  %1548 = vmatpush1.msra.mxu0 0.0
  %1549 = vmatprep.subr.mxu0 0.0
  %1550 = vmatpush1.msra.mxu0 0.0
  %1551 = vmatprep.subr.mxu0 0.0
  %1552 = vmatpush1.msra.mxu0 0.0
  %1553 = vmatprep.subr.mxu0 0.0
  %1554 = vmatpush1.msra.mxu0 0.0
  %1555 = vmatprep.subr.mxu0 0.0
  %1556 = vmatpush1.msra.mxu0 0.0
  %1557 = vmatprep.subr.mxu0 0.0
  %1558 = vmatpush1.msra.mxu0 0.0
  %1559 = vmatprep.subr.mxu0 0.0
  %1560 = vmatpush1.msra.mxu0 0.0
  %1561 = vmatprep.subr.mxu0 0.0
  %1562 = vmatpush1.msra.mxu0 0.0
  %1563 = vmatprep.subr.mxu0 0.0
  %1564 = vmatpush1.msra.mxu0 0.0
  %1565 = vmatprep.subr.mxu0 0.0
  %1566 = vmatpush1.msra.mxu0 0.0
  %1567 = vmatprep.subr.mxu0 0.0
  %1568 = vmatpush1.msra.mxu0 0.0
  %1569 = vmatprep.subr.mxu0 0.0
  %1570 = vmatpush1.msra.mxu0 0.0
  %1571 = vmatprep.subr.mxu0 0.0
  %1572 = vmatpush1.msra.mxu0 0.0
  %1573 = vmatprep.subr.mxu0 0.0
  %1574 = vmatpush1.msra.mxu0 0.0
  %1575 = vmatprep.subr.mxu0 0.0
  %1576 = vmatpush1.msra.mxu0 0.0
  %1577 = vmatprep.subr.mxu0 0.0
  %1578 = vmatpush1.msra.mxu0 0.0
  %1579 = vmatprep.subr.mxu0 0.0
  %1580 = vmatpush1.msra.mxu0 0.0
  %1581 = vmatprep.subr.mxu0 0.0
  %1582 = vmatpush1.msra.mxu0 0.0
  %1583 = vmatprep.subr.mxu0 0.0
  %1584 = vmatpush1.msra.mxu0 0.0
  %1585 = vmatprep.subr.mxu0 0.0
  %1586 = vmatpush1.msra.mxu0 0.0
  %1587 = vmatprep.mubr.f32.mxu0 0.0
  %1588 = vmatmul.mubr.f32.gmra.mrb[0].mxu0 %v1518
  %v1589 = vpop.f32.mrb[0].mxu0
  %v1590 = vadd.f32 0.0, %v1589
  %v1591 = vpop.f32.mrb[0].mxu0
  %v1592 = vadd.f32 0.0, %v1591
  %1593 = vmatprep.mubr.f32.mxu0 0.0
  %1594 = vmatmul.mubr.f32.gmra.mrb[0].mxu0 %v1521
  %v1595 = vpop.f32.mrb[0].mxu0
  %v1596 = vadd.f32 0.0, %v1595
  %v1597 = vpop.f32.mrb[0].mxu0
  %v1598 = vadd.f32 0.0, %v1597
  %1599 = vdwg.mxu0
  %1600 = vmatprep.subr.mxu0 %v1488
  %1601 = vmatpush1.msra.mxu0 %v1487
  %1602 = vmatprep.subr.mxu0 %v1496
  %1603 = vmatpush1.msra.mxu0 %v1495
  %1604 = vmatprep.subr.mxu0 %v1504
  %1605 = vmatpush1.msra.mxu0 %v1503
  %1606 = vmatprep.subr.mxu0 %v1512
  %1607 = vmatpush1.msra.mxu0 %v1511
  %1608 = vmatprep.subr.mxu0 0.0
  %1609 = vmatpush1.msra.mxu0 0.0
  %1610 = vmatprep.subr.mxu0 0.0
  %1611 = vmatpush1.msra.mxu0 0.0
  %1612 = vmatprep.subr.mxu0 0.0
  %1613 = vmatpush1.msra.mxu0 0.0
  %1614 = vmatprep.subr.mxu0 0.0
  %1615 = vmatpush1.msra.mxu0 0.0
  %1616 = vmatprep.subr.mxu0 0.0
  %1617 = vmatpush1.msra.mxu0 0.0
  %1618 = vmatprep.subr.mxu0 0.0
  %1619 = vmatpush1.msra.mxu0 0.0
  %1620 = vmatprep.subr.mxu0 0.0
  %1621 = vmatpush1.msra.mxu0 0.0
  %1622 = vmatprep.subr.mxu0 0.0
  %1623 = vmatpush1.msra.mxu0 0.0
  %1624 = vmatprep.subr.mxu0 0.0
  %1625 = vmatpush1.msra.mxu0 0.0
  %1626 = vmatprep.subr.mxu0 0.0
  %1627 = vmatpush1.msra.mxu0 0.0
  %1628 = vmatprep.subr.mxu0 0.0
  %1629 = vmatpush1.msra.mxu0 0.0
  %1630 = vmatprep.subr.mxu0 0.0
  %1631 = vmatpush1.msra.mxu0 0.0
  %1632 = vmatprep.subr.mxu0 0.0
  %1633 = vmatpush1.msra.mxu0 0.0
  %1634 = vmatprep.subr.mxu0 0.0
  %1635 = vmatpush1.msra.mxu0 0.0
  %1636 = vmatprep.subr.mxu0 0.0
  %1637 = vmatpush1.msra.mxu0 0.0
  %1638 = vmatprep.subr.mxu0 0.0
  %1639 = vmatpush1.msra.mxu0 0.0
  %1640 = vmatprep.subr.mxu0 0.0
  %1641 = vmatpush1.msra.mxu0 0.0
  %1642 = vmatprep.subr.mxu0 0.0
  %1643 = vmatpush1.msra.mxu0 0.0
  %1644 = vmatprep.subr.mxu0 0.0
  %1645 = vmatpush1.msra.mxu0 0.0
  %1646 = vmatprep.subr.mxu0 0.0
  %1647 = vmatpush1.msra.mxu0 0.0
  %1648 = vmatprep.subr.mxu0 0.0
  %1649 = vmatpush1.msra.mxu0 0.0
  %1650 = vmatprep.subr.mxu0 0.0
  %1651 = vmatpush1.msra.mxu0 0.0
  %1652 = vmatprep.subr.mxu0 0.0
  %1653 = vmatpush1.msra.mxu0 0.0
  %1654 = vmatprep.subr.mxu0 0.0
  %1655 = vmatpush1.msra.mxu0 0.0
  %1656 = vmatprep.subr.mxu0 0.0
  %1657 = vmatpush1.msra.mxu0 0.0
  %1658 = vmatprep.subr.mxu0 0.0
  %1659 = vmatpush1.msra.mxu0 0.0
  %1660 = vmatprep.subr.mxu0 0.0
  %1661 = vmatpush1.msra.mxu0 0.0
  %1662 = vmatprep.subr.mxu0 0.0
  %1663 = vmatpush1.msra.mxu0 0.0
  %1664 = vmatprep.mubr.f32.mxu0 0.0
  %1665 = vmatmul.mubr.f32.gmra.mrb[0].mxu0 %v1518
  %v1666 = vpop.f32.mrb[0].mxu0
  %v1667 = vadd.f32 0.0, %v1666
  %v1668 = vpop.f32.mrb[0].mxu0
  %v1669 = vadd.f32 0.0, %v1668
  %1670 = vmatprep.mubr.f32.mxu0 0.0
  %1671 = vmatmul.mubr.f32.gmra.mrb[0].mxu0 %v1521
  %v1672 = vpop.f32.mrb[0].mxu0
  %v1673 = vadd.f32 0.0, %v1672
  %v1674 = vpop.f32.mrb[0].mxu0
  %v1675 = vadd.f32 0.0, %v1674
  %1676 = vdwg.mxu0
  %1677 = vmatprep.subr.mxu0 %v1490
  %1678 = vmatpush1.msra.mxu0 %v1489
  %1679 = vmatprep.subr.mxu0 %v1498
  %1680 = vmatpush1.msra.mxu0 %v1497
  %1681 = vmatprep.subr.mxu0 %v1506
  %1682 = vmatpush1.msra.mxu0 %v1505
  %1683 = vmatprep.subr.mxu0 %v1514
  %1684 = vmatpush1.msra.mxu0 %v1513
  %1685 = vmatprep.subr.mxu0 0.0
  %1686 = vmatpush1.msra.mxu0 0.0
  %1687 = vmatprep.subr.mxu0 0.0
  %1688 = vmatpush1.msra.mxu0 0.0
  %1689 = vmatprep.subr.mxu0 0.0
  %1690 = vmatpush1.msra.mxu0 0.0
  %1691 = vmatprep.subr.mxu0 0.0
  %1692 = vmatpush1.msra.mxu0 0.0
  %1693 = vmatprep.subr.mxu0 0.0
  %1694 = vmatpush1.msra.mxu0 0.0
  %1695 = vmatprep.subr.mxu0 0.0
  %1696 = vmatpush1.msra.mxu0 0.0
  %1697 = vmatprep.subr.mxu0 0.0
  %1698 = vmatpush1.msra.mxu0 0.0
  %1699 = vmatprep.subr.mxu0 0.0
  %1700 = vmatpush1.msra.mxu0 0.0
  %1701 = vmatprep.subr.mxu0 0.0
  %1702 = vmatpush1.msra.mxu0 0.0
  %1703 = vmatprep.subr.mxu0 0.0
  %1704 = vmatpush1.msra.mxu0 0.0
  %1705 = vmatprep.subr.mxu0 0.0
  %1706 = vmatpush1.msra.mxu0 0.0
  %1707 = vmatprep.subr.mxu0 0.0
  %1708 = vmatpush1.msra.mxu0 0.0
  %1709 = vmatprep.subr.mxu0 0.0
  %1710 = vmatpush1.msra.mxu0 0.0
  %1711 = vmatprep.subr.mxu0 0.0
  %1712 = vmatpush1.msra.mxu0 0.0
  %1713 = vmatprep.subr.mxu0 0.0
  %1714 = vmatpush1.msra.mxu0 0.0
  %1715 = vmatprep.subr.mxu0 0.0
  %1716 = vmatpush1.msra.mxu0 0.0
  %1717 = vmatprep.subr.mxu0 0.0
  %1718 = vmatpush1.msra.mxu0 0.0
  %1719 = vmatprep.subr.mxu0 0.0
  %1720 = vmatpush1.msra.mxu0 0.0
  %1721 = vmatprep.subr.mxu0 0.0
  %1722 = vmatpush1.msra.mxu0 0.0
  %1723 = vmatprep.subr.mxu0 0.0
  %1724 = vmatpush1.msra.mxu0 0.0
  %1725 = vmatprep.subr.mxu0 0.0
  %1726 = vmatpush1.msra.mxu0 0.0
  %1727 = vmatprep.subr.mxu0 0.0
  %1728 = vmatpush1.msra.mxu0 0.0
  %1729 = vmatprep.subr.mxu0 0.0
  %1730 = vmatpush1.msra.mxu0 0.0
  %1731 = vmatprep.subr.mxu0 0.0
  %1732 = vmatpush1.msra.mxu0 0.0
  %1733 = vmatprep.subr.mxu0 0.0
  %1734 = vmatpush1.msra.mxu0 0.0
  %1735 = vmatprep.subr.mxu0 0.0
  %1736 = vmatpush1.msra.mxu0 0.0
  %1737 = vmatprep.subr.mxu0 0.0
  %1738 = vmatpush1.msra.mxu0 0.0
  %1739 = vmatprep.subr.mxu0 0.0
  %1740 = vmatpush1.msra.mxu0 0.0
  %1741 = vmatprep.mubr.f32.mxu0 0.0
  %1742 = vmatmul.mubr.f32.gmra.mrb[0].mxu0 %v1518
  %v1743 = vpop.f32.mrb[0].mxu0
  %v1744 = vadd.f32 0.0, %v1743
  %v1745 = vpop.f32.mrb[0].mxu0
  %v1746 = vadd.f32 0.0, %v1745
  %1747 = vmatprep.mubr.f32.mxu0 0.0
  %1748 = vmatmul.mubr.f32.gmra.mrb[0].mxu0 %v1521
  %v1749 = vpop.f32.mrb[0].mxu0
  %v1750 = vadd.f32 0.0, %v1749
  %v1751 = vpop.f32.mrb[0].mxu0
  %v1752 = vadd.f32 0.0, %v1751
  %1753 = vdwg.mxu0
  %1754 = vmatprep.subr.mxu0 %v1492
  %1755 = vmatpush1.msra.mxu0 %v1491
  %1756 = vmatprep.subr.mxu0 %v1500
  %1757 = vmatpush1.msra.mxu0 %v1499
  %1758 = vmatprep.subr.mxu0 %v1508
  %1759 = vmatpush1.msra.mxu0 %v1507
  %1760 = vmatprep.subr.mxu0 %v1516
  %1761 = vmatpush1.msra.mxu0 %v1515
  %1762 = vmatprep.subr.mxu0 0.0
  %1763 = vmatpush1.msra.mxu0 0.0
  %1764 = vmatprep.subr.mxu0 0.0
  %1765 = vmatpush1.msra.mxu0 0.0
  %1766 = vmatprep.subr.mxu0 0.0
  %1767 = vmatpush1.msra.mxu0 0.0
  %1768 = vmatprep.subr.mxu0 0.0
  %1769 = vmatpush1.msra.mxu0 0.0
  %1770 = vmatprep.subr.mxu0 0.0
  %1771 = vmatpush1.msra.mxu0 0.0
  %1772 = vmatprep.subr.mxu0 0.0
  %1773 = vmatpush1.msra.mxu0 0.0
  %1774 = vmatprep.subr.mxu0 0.0
  %1775 = vmatpush1.msra.mxu0 0.0
  %1776 = vmatprep.subr.mxu0 0.0
  %1777 = vmatpush1.msra.mxu0 0.0
  %1778 = vmatprep.subr.mxu0 0.0
  %1779 = vmatpush1.msra.mxu0 0.0
  %1780 = vmatprep.subr.mxu0 0.0
  %1781 = vmatpush1.msra.mxu0 0.0
  %1782 = vmatprep.subr.mxu0 0.0
  %1783 = vmatpush1.msra.mxu0 0.0
  %1784 = vmatprep.subr.mxu0 0.0
  %1785 = vmatpush1.msra.mxu0 0.0
  %1786 = vmatprep.subr.mxu0 0.0
  %1787 = vmatpush1.msra.mxu0 0.0
  %1788 = vmatprep.subr.mxu0 0.0
  %1789 = vmatpush1.msra.mxu0 0.0
  %1790 = vmatprep.subr.mxu0 0.0
  %1791 = vmatpush1.msra.mxu0 0.0
  %1792 = vmatprep.subr.mxu0 0.0
  %1793 = vmatpush1.msra.mxu0 0.0
  %1794 = vmatprep.subr.mxu0 0.0
  %1795 = vmatpush1.msra.mxu0 0.0
  %1796 = vmatprep.subr.mxu0 0.0
  %1797 = vmatpush1.msra.mxu0 0.0
  %1798 = vmatprep.subr.mxu0 0.0
  %1799 = vmatpush1.msra.mxu0 0.0
  %1800 = vmatprep.subr.mxu0 0.0
  %1801 = vmatpush1.msra.mxu0 0.0
  %1802 = vmatprep.subr.mxu0 0.0
  %1803 = vmatpush1.msra.mxu0 0.0
  %1804 = vmatprep.subr.mxu0 0.0
  %1805 = vmatpush1.msra.mxu0 0.0
  %1806 = vmatprep.subr.mxu0 0.0
  %1807 = vmatpush1.msra.mxu0 0.0
  %1808 = vmatprep.subr.mxu0 0.0
  %1809 = vmatpush1.msra.mxu0 0.0
  %1810 = vmatprep.subr.mxu0 0.0
  %1811 = vmatpush1.msra.mxu0 0.0
  %1812 = vmatprep.subr.mxu0 0.0
  %1813 = vmatpush1.msra.mxu0 0.0
  %1814 = vmatprep.subr.mxu0 0.0
  %1815 = vmatpush1.msra.mxu0 0.0
  %1816 = vmatprep.subr.mxu0 0.0
  %1817 = vmatpush1.msra.mxu0 0.0
  %1818 = vmatprep.mubr.f32.mxu0 0.0
  %1819 = vmatmul.mubr.f32.gmra.mrb[0].mxu0 %v1518
  %v1820 = vpop.f32.mrb[0].mxu0
  %v1821 = vadd.f32 0.0, %v1820
  %v1822 = vpop.f32.mrb[0].mxu0
  %v1823 = vadd.f32 0.0, %v1822
  %1824 = vmatprep.mubr.f32.mxu0 0.0
  %1825 = vmatmul.mubr.f32.gmra.mrb[0].mxu0 %v1521
  %v1826 = vpop.f32.mrb[0].mxu0
  %v1827 = vadd.f32 0.0, %v1826
  %v1828 = vpop.f32.mrb[0].mxu0
  %v1829 = vadd.f32 0.0, %v1828
  %1830 = vdwg.mxu0
  %v1832 = vlaneseq
  %v1833 = vshrl.u32 %v1832, 7
  %v1834 = vsub.s32 0, %v1833
  %v1835 = vrot.slane %v114, %v1834
  %v1836 = vlaneseq
  %v1837 = vshrl.u32 %v1836, 7
  %v1838 = vsub.s32 1, %v1837
  %v1839 = vrot.slane %v114, %v1838
  %v1840 = vlaneseq
  %v1841 = vshrl.u32 %v1840, 7
  %v1842 = vsub.s32 2, %v1841
  %v1843 = vrot.slane %v114, %v1842
  %v1844 = vlaneseq
  %v1845 = vshrl.u32 %v1844, 7
  %v1846 = vsub.s32 3, %v1845
  %v1847 = vrot.slane %v114, %v1846
  %v1848 = vlaneseq
  %v1849 = vshrl.u32 %v1848, 7
  %v1850 = vsub.s32 4, %v1849
  %v1851 = vrot.slane %v114, %v1850
  %v1852 = vlaneseq
  %v1853 = vshrl.u32 %v1852, 7
  %v1854 = vsub.s32 5, %v1853
  %v1855 = vrot.slane %v114, %v1854
  %v1856 = vlaneseq
  %v1857 = vshrl.u32 %v1856, 7
  %v1858 = vsub.s32 6, %v1857
  %v1859 = vrot.slane %v114, %v1858
  %v1860 = vlaneseq
  %v1861 = vshrl.u32 %v1860, 7
  %v1862 = vsub.s32 7, %v1861
  %v1863 = vrot.slane %v114, %v1862
  %v1872 = vsub.f32 %v1590, %v1835
  %v1873 = vsub.f32 %v1592, %v1839
  %v1874 = vsub.f32 %v1667, %v1843
  %v1875 = vsub.f32 %v1669, %v1847
  %v1876 = vsub.f32 %v1744, %v1851
  %v1877 = vsub.f32 %v1746, %v1855
  %v1878 = vsub.f32 %v1821, %v1859
  %v1879 = vsub.f32 %v1823, %v1863
  %v1880 = vsub.f32 %v1596, %v1835
  %v1881 = vsub.f32 %v1598, %v1839
  %v1882 = vsub.f32 %v1673, %v1843
  %v1883 = vsub.f32 %v1675, %v1847
  %v1884 = vsub.f32 %v1750, %v1851
  %v1885 = vsub.f32 %v1752, %v1855
  %v1886 = vsub.f32 %v1827, %v1859
  %v1887 = vsub.f32 %v1829, %v1863
  %v1888 = vmul.f32 %v1872, %v1872
  %v1889 = vmul.f32 %v1873, %v1873
  %v1890 = vmul.f32 %v1874, %v1874
  %v1891 = vmul.f32 %v1875, %v1875
  %v1892 = vmul.f32 %v1876, %v1876
  %v1893 = vmul.f32 %v1877, %v1877
  %v1894 = vmul.f32 %v1878, %v1878
  %v1895 = vmul.f32 %v1879, %v1879
  %v1896 = vmul.f32 %v1880, %v1880
  %v1897 = vmul.f32 %v1881, %v1881
  %v1898 = vmul.f32 %v1882, %v1882
  %v1899 = vmul.f32 %v1883, %v1883
  %v1900 = vmul.f32 %v1884, %v1884
  %v1901 = vmul.f32 %v1885, %v1885
  %v1902 = vmul.f32 %v1886, %v1886
  %v1903 = vmul.f32 %v1887, %v1887
  %v1905 = vlaneseq
  %v1906 = vshrl.u32 %v1905, 7
  %v1907 = vsub.s32 0, %v1906
  %v1908 = vrot.slane %v118, %v1907
  %v1909 = vlaneseq
  %v1910 = vshrl.u32 %v1909, 7
  %v1911 = vsub.s32 1, %v1910
  %v1912 = vrot.slane %v118, %v1911
  %v1913 = vlaneseq
  %v1914 = vshrl.u32 %v1913, 7
  %v1915 = vsub.s32 2, %v1914
  %v1916 = vrot.slane %v118, %v1915
  %v1917 = vlaneseq
  %v1918 = vshrl.u32 %v1917, 7
  %v1919 = vsub.s32 3, %v1918
  %v1920 = vrot.slane %v118, %v1919
  %v1921 = vlaneseq
  %v1922 = vshrl.u32 %v1921, 7
  %v1923 = vsub.s32 4, %v1922
  %v1924 = vrot.slane %v118, %v1923
  %v1925 = vlaneseq
  %v1926 = vshrl.u32 %v1925, 7
  %v1927 = vsub.s32 5, %v1926
  %v1928 = vrot.slane %v118, %v1927
  %v1929 = vlaneseq
  %v1930 = vshrl.u32 %v1929, 7
  %v1931 = vsub.s32 6, %v1930
  %v1932 = vrot.slane %v118, %v1931
  %v1933 = vlaneseq
  %v1934 = vshrl.u32 %v1933, 7
  %v1935 = vsub.s32 7, %v1934
  %v1936 = vrot.slane %v118, %v1935
  %v1945 = vmul.f32 %v1888, %v1908
  %v1946 = vmul.f32 %v1889, %v1912
  %v1947 = vmul.f32 %v1890, %v1916
  %v1948 = vmul.f32 %v1891, %v1920
  %v1949 = vmul.f32 %v1892, %v1924
  %v1950 = vmul.f32 %v1893, %v1928
  %v1951 = vmul.f32 %v1894, %v1932
  %v1952 = vmul.f32 %v1895, %v1936
  %v1953 = vmul.f32 %v1896, %v1908
  %v1954 = vmul.f32 %v1897, %v1912
  %v1955 = vmul.f32 %v1898, %v1916
  %v1956 = vmul.f32 %v1899, %v1920
  %v1957 = vmul.f32 %v1900, %v1924
  %v1958 = vmul.f32 %v1901, %v1928
  %v1959 = vmul.f32 %v1902, %v1932
  %v1960 = vmul.f32 %v1903, %v1936
  %v1961 = vmul.f32 %v1945, 1.442695
  %v1962 = vpow.pop %v1961
  %v1963 = vmul.f32 %v1946, 1.442695
  %v1964 = vpow.pop %v1963
  %v1965 = vmul.f32 %v1947, 1.442695
  %v1966 = vpow.pop %v1965
  %v1967 = vmul.f32 %v1948, 1.442695
  %v1968 = vpow.pop %v1967
  %v1969 = vmul.f32 %v1949, 1.442695
  %v1970 = vpow.pop %v1969
  %v1971 = vmul.f32 %v1950, 1.442695
  %v1972 = vpow.pop %v1971
  %v1973 = vmul.f32 %v1951, 1.442695
  %v1974 = vpow.pop %v1973
  %v1975 = vmul.f32 %v1952, 1.442695
  %v1976 = vpow.pop %v1975
  %v1977 = vmul.f32 %v1953, 1.442695
  %v1978 = vpow.pop %v1977
  %v1979 = vmul.f32 %v1954, 1.442695
  %v1980 = vpow.pop %v1979
  %v1981 = vmul.f32 %v1955, 1.442695
  %v1982 = vpow.pop %v1981
  %v1983 = vmul.f32 %v1956, 1.442695
  %v1984 = vpow.pop %v1983
  %v1985 = vmul.f32 %v1957, 1.442695
  %v1986 = vpow.pop %v1985
  %v1987 = vmul.f32 %v1958, 1.442695
  %v1988 = vpow.pop %v1987
  %v1989 = vmul.f32 %v1959, 1.442695
  %v1990 = vpow.pop %v1989
  %v1991 = vmul.f32 %v1960, 1.442695
  %v1992 = vpow.pop %v1991
  %v1994 = vlaneseq
  %v1995 = vshrl.u32 %v1994, 7
  %v1996 = vsub.s32 0, %v1995
  %v1997 = vrot.slane %v122, %v1996
  %v1998 = vlaneseq
  %v1999 = vshrl.u32 %v1998, 7
  %v2000 = vsub.s32 1, %v1999
  %v2001 = vrot.slane %v122, %v2000
  %v2002 = vlaneseq
  %v2003 = vshrl.u32 %v2002, 7
  %v2004 = vsub.s32 2, %v2003
  %v2005 = vrot.slane %v122, %v2004
  %v2006 = vlaneseq
  %v2007 = vshrl.u32 %v2006, 7
  %v2008 = vsub.s32 3, %v2007
  %v2009 = vrot.slane %v122, %v2008
  %v2010 = vlaneseq
  %v2011 = vshrl.u32 %v2010, 7
  %v2012 = vsub.s32 4, %v2011
  %v2013 = vrot.slane %v122, %v2012
  %v2014 = vlaneseq
  %v2015 = vshrl.u32 %v2014, 7
  %v2016 = vsub.s32 5, %v2015
  %v2017 = vrot.slane %v122, %v2016
  %v2018 = vlaneseq
  %v2019 = vshrl.u32 %v2018, 7
  %v2020 = vsub.s32 6, %v2019
  %v2021 = vrot.slane %v122, %v2020
  %v2022 = vlaneseq
  %v2023 = vshrl.u32 %v2022, 7
  %v2024 = vsub.s32 7, %v2023
  %v2025 = vrot.slane %v122, %v2024
  %v2034 = vmul.f32 %v1962, %v1997
  %v2035 = vmul.f32 %v1964, %v2001
  %v2036 = vmul.f32 %v1966, %v2005
  %v2037 = vmul.f32 %v1968, %v2009
  %v2038 = vmul.f32 %v1970, %v2013
  %v2039 = vmul.f32 %v1972, %v2017
  %v2040 = vmul.f32 %v1974, %v2021
  %v2041 = vmul.f32 %v1976, %v2025
  %v2042 = vmul.f32 %v1978, %v1997
  %v2043 = vmul.f32 %v1980, %v2001
  %v2044 = vmul.f32 %v1982, %v2005
  %v2045 = vmul.f32 %v1984, %v2009
  %v2046 = vmul.f32 %v1986, %v2013
  %v2047 = vmul.f32 %v1988, %v2017
  %v2048 = vmul.f32 %v1990, %v2021
  %v2049 = vmul.f32 %v1992, %v2025
  %v2050 = vadd.f32 %v2034, %v2035
  %v2051 = vadd.f32 %v2050, %v2036
  %v2052 = vadd.f32 %v2051, %v2037
  %v2053 = vadd.f32 %v2052, %v2038
  %v2054 = vadd.f32 %v2053, %v2039
  %v2055 = vadd.f32 %v2054, %v2040
  %v2056 = vadd.f32 %v2055, %v2041
  %2057 = vadd.xlane.f32.xlu0 %v2056
  %v2058 = vpop.xlane.xlu0 %2057
  %v2059 = vadd.f32 %v2042, %v2043
  %v2060 = vadd.f32 %v2059, %v2044
  %v2061 = vadd.f32 %v2060, %v2045
  %v2062 = vadd.f32 %v2061, %v2046
  %v2063 = vadd.f32 %v2062, %v2047
  %v2064 = vadd.f32 %v2063, %v2048
  %v2065 = vadd.f32 %v2064, %v2049
  %2066 = vadd.xlane.f32.xlu0 %v2065
  %v2067 = vpop.xlane.xlu0 %2066
  %v2068 = vlaneseq
  %v2069 = vshrl.u32 %v2068, 7
  %v2070 = vsub.s32 0, %v2069
  %v2071 = vrot.slane %v111, %v2070
  %v2072 = vadd.f32 %v2058, %v2071
  %v2073 = vadd.f32 %v2067, %v2071
  %v2074 = vsub.f32 0.0, %v2072
  %v2075 = vsub.f32 0.0, %v2073
  %v2076 = vmul.f32 %v2074, 1.442695
  %v2077 = vpow.pop %v2076
  %v2078 = vmul.f32 %v2075, 1.442695
  %v2079 = vpow.pop %v2078
  %v2080 = vadd.f32 %v2077, 1.0
  %v2081 = vadd.f32 %v2079, 1.0
  %v2082 = vrcp.pop %v2080
  %v2083 = vmul.f32 1.0, %v2082
  %v2084 = vrcp.pop %v2081
  %v2085 = vmul.f32 1.0, %v2084
  %2087 = vset.pattern.permute.xlu0 0
  %2088 = vperm.xlu0 %2087, %v2083
  %v2089 = vpop.permute.xlu0 %2088
  %2092 = vset.pattern.permute.xlu0 0
  %2093 = vperm.xlu0 %2092, %v2085
  %v2094 = vpop.permute.xlu0 %2093
  %2096 = vst [vmem:[%s5] sm:$0xff] %v2089
  %2097 = vst [vmem:[%s5 + $0x8] sm:$0xff] %v2094
  // Predicated region
  $region22: #{disjoint_gcn_fuzzy.1} parent=0 // pred_check
    _
  $region23: #{disjoint_gcn_fuzzy.1} parent=0 // pred_check_branch
    %2099 = sbr.rel (0) target = $region25
  $region24: #{disjoint_gcn_fuzzy.1} parent=0 // pred_region
    _
  $region25: #{disjoint_gcn_fuzzy.1} parent=0 // pred_fallthru
    _
  // Predicated region
  $region26: #{disjoint_gcn_fuzzy.1} parent=0 // pred_check
    _
  $region27: #{disjoint_gcn_fuzzy.1} parent=0 // pred_check_branch
    %2101 = sbr.rel (0) target = $region29
  $region28: #{disjoint_gcn_fuzzy.1} parent=0 // pred_region
    _
  $region29: #{disjoint_gcn_fuzzy.1} parent=0 // pred_fallthru
    _

</llo_original>
